<compile_context>
chip_gen: v7x
topology: tpu7x:2x2x1
jax: 0.10.0
libtpu: 0.0.40
codegen_flags: <defaults>
</compile_context>

<pallas_src>
import functools
import math

import jax
import jax.numpy as jnp
from jax.experimental import pallas as pl
from jax.experimental.pallas import tpu as pltpu


# Row indices into the packed (9, D) parameter slab.
_BQ, _BK, _BV, _BO, _G1, _B1, _G2, _B2, _BFF2 = range(9)


def _layernorm(x, gamma, beta, eps):
    # Matches the PyTorch module: unbiased std (ddof=1), divide by (std + eps).
    n = x.shape[-1]
    mean = jnp.mean(x, axis=-1, keepdims=True)
    var = jnp.sum((x - mean) ** 2, axis=-1, keepdims=True) * (1.0 / (n - 1))
    inv = pl.reciprocal(jnp.sqrt(var) + eps, approx=True)     # EUP, not VALU
    return gamma * (x - mean) * inv + beta


def _encoder_layer_kernel(*refs, num_heads, has_mask, eps=1e-6):
    if has_mask:
        (x_ref, bias_ref, wq_ref, wk_ref, wv_ref, wo_ref, w1_ref, w2_ref,
         pv_ref, b1_ref, o_ref, k_scr, v_scr) = refs
    else:
        (x_ref, wq_ref, wk_ref, wv_ref, wo_ref, w1_ref, w2_ref,
         pv_ref, b1_ref, o_ref, k_scr, v_scr) = refs
        bias_ref = None

    f32, bf16 = jnp.float32, jnp.bfloat16
    S, D = x_ref.shape[1], x_ref.shape[2]
    tq = o_ref.shape[1]
    H = num_heads
    d_k = D // H
    scale = 1.0 / math.sqrt(d_k)
    qi = pl.program_id(1)

    bq = pv_ref[_BQ:_BQ + 1, :]
    bk = pv_ref[_BK:_BK + 1, :]
    bv = pv_ref[_BV:_BV + 1, :]
    bo = pv_ref[_BO:_BO + 1, :]
    g1 = pv_ref[_G1:_G1 + 1, :]
    beta1 = pv_ref[_B1:_B1 + 1, :]
    g2 = pv_ref[_G2:_G2 + 1, :]
    beta2 = pv_ref[_B2:_B2 + 1, :]
    b2 = pv_ref[_BFF2:_BFF2 + 1, :]

    # ----- K/V for the whole sequence, once per batch element (qi == 0) -----
    @pl.when(qi == 0)
    def _():
        x_full = x_ref[0].astype(f32)                          # (S, D)
        h1 = _layernorm(x_full, g1, beta1, eps).astype(bf16)
        k = jnp.dot(h1, wk_ref[...], preferred_element_type=f32) + bk
        v = jnp.dot(h1, wv_ref[...], preferred_element_type=f32) + bv
        # (S, D) -> (H, S, d_k): heads become the batch dim of the MXU GEMMs.
        k_scr[...] = jnp.swapaxes(k.reshape(S, H, d_k), 0, 1).astype(bf16)
        v_scr[...] = jnp.swapaxes(v.reshape(S, H, d_k), 0, 1).astype(bf16)

    # ------------------ residual 1 for this query block ---------------------
    row0 = pl.multiple_of(qi * tq, tq)
    x_blk = x_ref[0, pl.ds(row0, tq), :].astype(f32)           # (tq, D)
    h1_blk = _layernorm(x_blk, g1, beta1, eps)
    q = jnp.dot(h1_blk.astype(bf16), wq_ref[...],
                preferred_element_type=f32) + bq               # (tq, D)
    qh = jnp.swapaxes(q.reshape(tq, H, d_k), 0, 1).astype(bf16)  # (H, tq, d_k)

    kh = k_scr[...]                                            # (H, S, d_k) bf16
    vh = v_scr[...]

    # scores for all heads in one batched GEMM: contract d_k, batch over H.
    s = jax.lax.dot_general(qh, kh, (((2,), (2,)), ((0,), (0,))),
                            preferred_element_type=f32) * scale  # (H, tq, S)
    if has_mask:
        s = s + bias_ref[...][None, :, :]                      # additive -1e9 bias
    s = s - jnp.max(s, axis=-1, keepdims=True)                 # stable softmax
    e = jnp.exp(s)
    p = e * pl.reciprocal(jnp.sum(e, axis=-1, keepdims=True), approx=True)

    # context for all heads in one batched GEMM: contract S, batch over H.
    ctx = jax.lax.dot_general(p.astype(bf16), vh, (((2,), (1,)), ((0,), (0,))),
                              preferred_element_type=f32)      # (H, tq, d_k)
    ctx = jnp.swapaxes(ctx, 0, 1).reshape(tq, D)               # concat heads
    attn = jnp.dot(ctx.astype(bf16), wo_ref[...],
                   preferred_element_type=f32) + bo            # one K=D GEMM
    x1 = x_blk + attn                                          # dropout == identity

    # ------------------------ residual 2 (FFN) ------------------------------
    h2 = _layernorm(x1, g2, beta2, eps)
    f = jnp.dot(h2.astype(bf16), w1_ref[...],
                preferred_element_type=f32) + b1_ref[...]      # (tq, F)
    c = math.sqrt(2.0 / math.pi)
    g = 0.5 * f * (1.0 + jnp.tanh(c * (f + 0.044715 * f * f * f)))  # GELU, f32
    y = jnp.dot(g.astype(bf16), w2_ref[...],
                preferred_element_type=f32) + b2

    # TODO(synk): dropout layers are identity (eval mode); training dropout
    # would need pltpu.prng_seed / prng_random_bits.
    o_ref[0] = (x1 + y).astype(o_ref.dtype)


def _pick_tq(S):
    if S > 256 and S % 256 == 0:
        return 256
    if S > 128 and S % 128 == 0:
        return 128
    return S


def encoder_layer(x, params, mask=None):
    """Forward pass of EncoderLayer. x: (B, S, D) float32; mask: None or (S, S)."""
    B, S, D = x.shape
    H = params["num_heads"]
    F = params["w1"].shape[1]
    assert D % H == 0, "d_model must be divisible by attn_heads"
    d_k = D // H
    tq = _pick_tq(S)
    nq = S // tq

    f32, bf16 = jnp.float32, jnp.bfloat16

    # bf16 weight tiles: ~2-4x MXU throughput + half the weight VMEM/HBM bytes.
    wq = params["wq"].astype(bf16)
    wk = params["wk"].astype(bf16)
    wv = params["wv"].astype(bf16)
    wo = params["wo"].astype(bf16)
    w1 = params["w1"].astype(bf16)
    w2 = params["w2"].astype(bf16)

    # Pack the tiny (1, D)-wide params into one slab -> single DMA descriptor.
    pvec = jnp.concatenate(
        [params["bq"], params["bk"], params["bv"], params["bo"],
         params["ln1_g"], params["ln1_b"], params["ln2_g"], params["ln2_b"],
         params["b2"]], axis=0).astype(f32)                    # (9, D)
    b1 = params["b1"].astype(f32)                              # (1, F)

    def _fixed(shape):
        nd = len(shape)
        return pl.BlockSpec(shape, lambda b, q, _nd=nd: (0,) * _nd)

    in_specs = [pl.BlockSpec((1, S, D), lambda b, q: (b, 0, 0))]   # x (full seq)
    inputs = [x]
    has_mask = mask is not None
    if has_mask:
        # Additive bias computed once in the wrapper; kernel just adds it.
        bias = jnp.where(mask == 0, -1e9, 0.0).astype(f32)         # (S, S)
        in_specs.append(pl.BlockSpec((tq, S), lambda b, q: (q, 0)))
        inputs.append(bias)
    in_specs += [_fixed((D, D)), _fixed((D, D)), _fixed((D, D)), _fixed((D, D)),
                 _fixed((D, F)), _fixed((F, D)),
                 _fixed((9, D)), _fixed((1, F))]
    inputs += [wq, wk, wv, wo, w1, w2, pvec, b1]

    flops = B * (8 * S * D * D + 4 * S * S * D + 4 * S * D * F)
    transcendentals = B * (H * S * S + S * F + 4 * S)
    bytes_accessed = (4 * 2 * B * S * D + 2 * (4 * D * D + 2 * D * F)
                      + 4 * (9 * D + F) + (4 * S * S if has_mask else 0))

    kernel = functools.partial(_encoder_layer_kernel,
                               num_heads=H, has_mask=has_mask)

    return pl.pallas_call(
        kernel,
        out_shape=jax.ShapeDtypeStruct((B, S, D), x.dtype),
        grid=(B, nq),
        in_specs=in_specs,
        out_specs=pl.BlockSpec((1, tq, D), lambda b, q: (b, q, 0)),
        scratch_shapes=[pltpu.VMEM((H, S, d_k), bf16),     # K, persistent per batch
                        pltpu.VMEM((H, S, d_k), bf16)],    # V
        compiler_params=pltpu.CompilerParams(
            # q axis carries the K/V scratch (filled at qi == 0) -> "arbitrary".
            dimension_semantics=("parallel", "arbitrary"),
            # Above the 16/32 MiB scoped defaults; safe on v5e/v6e/v7x.
            vmem_limit_bytes=64 * 1024 * 1024),
        cost_estimate=pl.CostEstimate(
            flops=flops, transcendentals=transcendentals,
            bytes_accessed=bytes_accessed),
    )(*inputs)


# ----------------------------- pure-JAX reference -----------------------------
def _layernorm_ref(x, gamma, beta, eps=1e-6):
    mean = x.mean(-1, keepdims=True)
    var = ((x - mean) ** 2).sum(-1, keepdims=True) / (x.shape[-1] - 1)
    return gamma * (x - mean) / (jnp.sqrt(var) + eps) + beta


def _encoder_layer_ref(x, p, mask=None):
    hp = jax.lax.Precision.HIGHEST
    mm = functools.partial(jnp.matmul, precision=hp)
    B, S, D = x.shape
    H = p["num_heads"]
    d_k = D // H

    h1 = _layernorm_ref(x, p["ln1_g"][0], p["ln1_b"][0])
    q = mm(h1, p["wq"]) + p["bq"][0]
    k = mm(h1, p["wk"]) + p["bk"][0]
    v = mm(h1, p["wv"]) + p["bv"][0]
    qh = q.reshape(B, S, H, d_k).transpose(0, 2, 1, 3)
    kh = k.reshape(B, S, H, d_k).transpose(0, 2, 1, 3)
    vh = v.reshape(B, S, H, d_k).transpose(0, 2, 1, 3)
    s = jnp.einsum("bhqd,bhkd->bhqk", qh, kh, precision=hp) / math.sqrt(d_k)
    if mask is not None:
        s = jnp.where(mask == 0, -1e9, s)
    pa = jax.nn.softmax(s, axis=-1)
    a = jnp.einsum("bhqk,bhkd->bhqd", pa, vh, precision=hp)
    a = a.transpose(0, 2, 1, 3).reshape(B, S, D)
    x1 = x + mm(a, p["wo"]) + p["bo"][0]

    h2 = _layernorm_ref(x1, p["ln2_g"][0], p["ln2_b"][0])
    f = mm(h2, p["w1"]) + p["b1"][0]
    c = math.sqrt(2.0 / math.pi)
    g = 0.5 * f * (1.0 + jnp.tanh(c * (f + 0.044715 * f ** 3)))
    return x1 + mm(g, p["w2"]) + p["b2"][0]


if __name__ == "__main__":
    # batch=2, seq=8, hidden=32, heads=4, feed_forward_hidden=128
    B, S, D, H, F = 2, 8, 32, 4, 128

    key = jax.random.PRNGKey(0)
    kx, *kw = jax.random.split(key, 20)

    def rnd(k, shape, scale=0.1):
        return scale * jax.random.normal(k, shape, dtype=jnp.float32)

    params = {
        "num_heads": H,
        "wq": rnd(kw[0], (D, D)), "bq": rnd(kw[1], (1, D)),
        "wk": rnd(kw[2], (D, D)), "bk": rnd(kw[3], (1, D)),
        "wv": rnd(kw[4], (D, D)), "bv": rnd(kw[5], (1, D)),
        "wo": rnd(kw[6], (D, D)), "bo": rnd(kw[7], (1, D)),
        "ln1_g": 1.0 + rnd(kw[8], (1, D)), "ln1_b": rnd(kw[9], (1, D)),
        "ln2_g": 1.0 + rnd(kw[10], (1, D)), "ln2_b": rnd(kw[11], (1, D)),
        "w1": rnd(kw[12], (D, F)), "b1": rnd(kw[13], (1, F)),
        "w2": rnd(kw[14], (F, D)), "b2": rnd(kw[15], (1, D)),
    }
    x = jax.random.normal(kx, (B, S, D), dtype=jnp.float32)

    # --- no-mask path (matches the PyTorch spec default mask=False) ---
    out = jax.block_until_ready(encoder_layer(x, params, mask=None))
    ref = _encoder_layer_ref(x, params, mask=None)
    assert out.shape == (B, S, D), out.shape
    assert out.dtype == jnp.float32, out.dtype
    max_err = float(jnp.max(jnp.abs(out - ref)))
    # tolerance accommodates bf16 MXU operands vs the f32 HIGHEST reference
    assert jnp.allclose(out, ref, atol=3e-2, rtol=3e-2), f"mismatch: {max_err}"

    # --- masked path (additive-bias specialization), e.g. causal mask ---
    causal = jnp.tril(jnp.ones((S, S), jnp.float32))
    out_m = jax.block_until_ready(encoder_layer(x, params, mask=causal))
    ref_m = _encoder_layer_ref(x, params, mask=causal)
    max_err_m = float(jnp.max(jnp.abs(out_m - ref_m)))
    assert jnp.allclose(out_m, ref_m, atol=3e-2, rtol=3e-2), f"mismatch: {max_err_m}"

    print("KERNEL_OK")
</pallas_src>

<mosaic_0001>
module attributes {stable_mosaic.version = 11 : i64} {
  func.func @_encoder_layer_kernel(%arg0: i32, %arg1: i32, %arg2: memref<1x8x32xf32, #tpu.memory_space<vmem>>, %arg3: memref<32x32xbf16, #tpu.memory_space<vmem>>, %arg4: memref<32x32xbf16, #tpu.memory_space<vmem>>, %arg5: memref<32x32xbf16, #tpu.memory_space<vmem>>, %arg6: memref<32x32xbf16, #tpu.memory_space<vmem>>, %arg7: memref<32x128xbf16, #tpu.memory_space<vmem>>, %arg8: memref<128x32xbf16, #tpu.memory_space<vmem>>, %arg9: memref<9x32xf32, #tpu.memory_space<vmem>>, %arg10: memref<1x128xf32, #tpu.memory_space<vmem>>, %arg11: memref<1x8x32xf32, #tpu.memory_space<vmem>>, %arg12: memref<4x8x8xbf16, #tpu.memory_space<vmem>>, %arg13: memref<4x8x8xbf16, #tpu.memory_space<vmem>>) attributes {dimension_semantics = [#tpu.dimension_semantics<parallel>, #tpu.dimension_semantics<arbitrary>], iteration_bounds = array<i64: 2, 1>, scalar_prefetch = 0 : i64, scratch_operands = 2 : i64, tpu.core_type = #tpu.core_type<tc>, window_params = [{transform_indices = @transform_0, window_bounds = array<i64: 1, 8, 32>}, {pipeline_mode = #tpu.pipeline_mode<synchronous>, transform_indices = @transform_1, window_bounds = array<i64: 32, 32>}, {pipeline_mode = #tpu.pipeline_mode<synchronous>, transform_indices = @transform_2, window_bounds = array<i64: 32, 32>}, {pipeline_mode = #tpu.pipeline_mode<synchronous>, transform_indices = @transform_3, window_bounds = array<i64: 32, 32>}, {pipeline_mode = #tpu.pipeline_mode<synchronous>, transform_indices = @transform_4, window_bounds = array<i64: 32, 32>}, {pipeline_mode = #tpu.pipeline_mode<synchronous>, transform_indices = @transform_5, window_bounds = array<i64: 32, 128>}, {pipeline_mode = #tpu.pipeline_mode<synchronous>, transform_indices = @transform_6, window_bounds = array<i64: 128, 32>}, {pipeline_mode = #tpu.pipeline_mode<synchronous>, transform_indices = @transform_7, window_bounds = array<i64: 9, 32>}, {pipeline_mode = #tpu.pipeline_mode<synchronous>, transform_indices = @transform_8, window_bounds = array<i64: 1, 128>}, {transform_indices = @transform_9, window_bounds = array<i64: 1, 8, 32>}]} {
    %c0 = arith.constant 0 : index
    %c0_0 = arith.constant 0 : index
    %0 = vector.load %arg9[%c0, %c0_0] : memref<9x32xf32, #tpu.memory_space<vmem>>, vector<1x32xf32>
    %c1 = arith.constant 1 : index
    %c0_1 = arith.constant 0 : index
    %1 = vector.load %arg9[%c1, %c0_1] : memref<9x32xf32, #tpu.memory_space<vmem>>, vector<1x32xf32>
    %c2 = arith.constant 2 : index
    %c0_2 = arith.constant 0 : index
    %2 = vector.load %arg9[%c2, %c0_2] : memref<9x32xf32, #tpu.memory_space<vmem>>, vector<1x32xf32>
    %c3 = arith.constant 3 : index
    %c0_3 = arith.constant 0 : index
    %3 = vector.load %arg9[%c3, %c0_3] : memref<9x32xf32, #tpu.memory_space<vmem>>, vector<1x32xf32>
    %c4 = arith.constant 4 : index
    %c0_4 = arith.constant 0 : index
    %4 = vector.load %arg9[%c4, %c0_4] : memref<9x32xf32, #tpu.memory_space<vmem>>, vector<1x32xf32>
    %c5 = arith.constant 5 : index
    %c0_5 = arith.constant 0 : index
    %5 = vector.load %arg9[%c5, %c0_5] : memref<9x32xf32, #tpu.memory_space<vmem>>, vector<1x32xf32>
    %c6 = arith.constant 6 : index
    %c0_6 = arith.constant 0 : index
    %6 = vector.load %arg9[%c6, %c0_6] : memref<9x32xf32, #tpu.memory_space<vmem>>, vector<1x32xf32>
    %c7 = arith.constant 7 : index
    %c0_7 = arith.constant 0 : index
    %7 = vector.load %arg9[%c7, %c0_7] : memref<9x32xf32, #tpu.memory_space<vmem>>, vector<1x32xf32>
    %c8 = arith.constant 8 : index
    %c0_8 = arith.constant 0 : index
    %8 = vector.load %arg9[%c8, %c0_8] : memref<9x32xf32, #tpu.memory_space<vmem>>, vector<1x32xf32>
    %c0_i32 = arith.constant 0 : i32
    %9 = arith.cmpi eq, %arg1, %c0_i32 : i32
    %10 = arith.extui %9 : i1 to i32
    %c0_i32_9 = arith.constant 0 : i32
    %11 = arith.cmpi ne, %10, %c0_i32_9 : i32
    scf.if %11 {
      %c0_53 = arith.constant 0 : index
      %c0_54 = arith.constant 0 : index
      %c0_55 = arith.constant 0 : index
      %124 = vector.load %arg2[%c0_53, %c0_54, %c0_55] : memref<1x8x32xf32, #tpu.memory_space<vmem>>, vector<1x8x32xf32>
      %125 = vector.shape_cast %124 : vector<1x8x32xf32> to vector<8x32xf32>
      %cst_56 = arith.constant dense<0.000000e+00> : vector<8xf32>
      %126 = vector.multi_reduction <add>, %125, %cst_56 [1] : vector<8x32xf32> to vector<8xf32>
      %127 = vector.shape_cast %126 : vector<8xf32> to vector<8x1xf32>
      %cst_57 = arith.constant 3.200000e+01 : f32
      %128 = vector.broadcast %cst_57 : f32 to vector<8x1xf32>
      %129 = arith.divf %127, %128 : vector<8x1xf32>
      %130 = vector.broadcast %129 : vector<8x1xf32> to vector<8x32xf32>
      %131 = arith.subf %125, %130 : vector<8x32xf32>
      %132 = arith.mulf %131, %131 : vector<8x32xf32>
      %cst_58 = arith.constant dense<0.000000e+00> : vector<8xf32>
      %133 = vector.multi_reduction <add>, %132, %cst_58 [1] : vector<8x32xf32> to vector<8xf32>
      %134 = vector.shape_cast %133 : vector<8xf32> to vector<8x1xf32>
      %cst_59 = arith.constant 0.0322580636 : f32
      %135 = vector.broadcast %cst_59 : f32 to vector<8x1xf32>
      %136 = arith.mulf %134, %135 : vector<8x1xf32>
      %137 = math.sqrt %136 : vector<8x1xf32>
      %cst_60 = arith.constant 9.99999997E-7 : f32
      %138 = vector.broadcast %cst_60 : f32 to vector<8x1xf32>
      %139 = arith.addf %137, %138 : vector<8x1xf32>
      %140 = tpu.reciprocal %139 {approx = true} : vector<8x1xf32> -> vector<8x1xf32>
      %141 = vector.broadcast %129 : vector<8x1xf32> to vector<8x32xf32>
      %142 = arith.subf %125, %141 : vector<8x32xf32>
      %143 = vector.broadcast %4 : vector<1x32xf32> to vector<8x32xf32>
      %144 = arith.mulf %143, %142 : vector<8x32xf32>
      %145 = vector.broadcast %140 : vector<8x1xf32> to vector<8x32xf32>
      %146 = arith.mulf %144, %145 : vector<8x32xf32>
      %147 = vector.broadcast %5 : vector<1x32xf32> to vector<8x32xf32>
      %148 = arith.addf %146, %147 : vector<8x32xf32>
      %149 = arith.truncf %148 : vector<8x32xf32> to vector<8x32xbf16>
      %c0_61 = arith.constant 0 : index
      %c0_62 = arith.constant 0 : index
      %150 = vector.load %arg4[%c0_61, %c0_62] : memref<32x32xbf16, #tpu.memory_space<vmem>>, vector<32x32xbf16>
      %cst_63 = arith.constant dense<0.000000e+00> : vector<8x32xf32>
      %151 = tpu.matmul %149, %150, %cst_63 {dimension_numbers = #tpu.dot_dimension_numbers<[1], [0], [0], [1], [0, 0, 1, 1], [], []>} : vector<8x32xbf16>, vector<32x32xbf16>, vector<8x32xf32> -> vector<8x32xf32>
      %152 = vector.broadcast %1 : vector<1x32xf32> to vector<8x32xf32>
      %153 = arith.addf %151, %152 : vector<8x32xf32>
      %c0_64 = arith.constant 0 : index
      %c0_65 = arith.constant 0 : index
      %154 = vector.load %arg5[%c0_64, %c0_65] : memref<32x32xbf16, #tpu.memory_space<vmem>>, vector<32x32xbf16>
      %cst_66 = arith.constant dense<0.000000e+00> : vector<8x32xf32>
      %155 = tpu.matmul %149, %154, %cst_66 {dimension_numbers = #tpu.dot_dimension_numbers<[1], [0], [0], [1], [0, 0, 1, 1], [], []>} : vector<8x32xbf16>, vector<32x32xbf16>, vector<8x32xf32> -> vector<8x32xf32>
      %156 = vector.broadcast %2 : vector<1x32xf32> to vector<8x32xf32>
      %157 = arith.addf %155, %156 : vector<8x32xf32>
      %158 = vector.shape_cast %153 : vector<8x32xf32> to vector<8x4x8xf32>
      %159 = tpu.transpose %158, [1, 0, 2] : vector<8x4x8xf32> -> vector<4x8x8xf32>
      %160 = arith.truncf %159 : vector<4x8x8xf32> to vector<4x8x8xbf16>
      %c0_67 = arith.constant 0 : index
      %c0_68 = arith.constant 0 : index
      %c0_69 = arith.constant 0 : index
      %161 = vector.load %arg12[%c0_67, %c0_68, %c0_69] : memref<4x8x8xbf16, #tpu.memory_space<vmem>>, vector<4x8x8xbf16>
      tpu.vector_store %arg12[%c0_67, %c0_68, %c0_69], %160 {strides = array<i32>} : memref<4x8x8xbf16, #tpu.memory_space<vmem>>, vector<4x8x8xbf16>,
      %162 = vector.shape_cast %157 : vector<8x32xf32> to vector<8x4x8xf32>
      %163 = tpu.transpose %162, [1, 0, 2] : vector<8x4x8xf32> -> vector<4x8x8xf32>
      %164 = arith.truncf %163 : vector<4x8x8xf32> to vector<4x8x8xbf16>
      %c0_70 = arith.constant 0 : index
      %c0_71 = arith.constant 0 : index
      %c0_72 = arith.constant 0 : index
      %165 = vector.load %arg13[%c0_70, %c0_71, %c0_72] : memref<4x8x8xbf16, #tpu.memory_space<vmem>>, vector<4x8x8xbf16>
      tpu.vector_store %arg13[%c0_70, %c0_71, %c0_72], %164 {strides = array<i32>} : memref<4x8x8xbf16, #tpu.memory_space<vmem>>, vector<4x8x8xbf16>,
    } else {
    }
    %c8_i32 = arith.constant 8 : i32
    %12 = arith.muli %arg1, %c8_i32 : i32
    %13 = tpu.assume_multiple %12, 8 : i32
    %c0_10 = arith.constant 0 : index
    %14 = arith.index_cast %13 : i32 to index
    %c0_11 = arith.constant 0 : index
    %15 = vector.load %arg2[%c0_10, %14, %c0_11] : memref<1x8x32xf32, #tpu.memory_space<vmem>>, vector<1x8x32xf32>
    %16 = vector.shape_cast %15 : vector<1x8x32xf32> to vector<8x32xf32>
    %cst = arith.constant dense<0.000000e+00> : vector<8xf32>
    %17 = vector.multi_reduction <add>, %16, %cst [1] : vector<8x32xf32> to vector<8xf32>
    %18 = vector.shape_cast %17 : vector<8xf32> to vector<8x1xf32>
    %cst_12 = arith.constant 3.200000e+01 : f32
    %19 = vector.broadcast %cst_12 : f32 to vector<8x1xf32>
    %20 = arith.divf %18, %19 : vector<8x1xf32>
    %21 = vector.broadcast %20 : vector<8x1xf32> to vector<8x32xf32>
    %22 = arith.subf %16, %21 : vector<8x32xf32>
    %23 = arith.mulf %22, %22 : vector<8x32xf32>
    %cst_13 = arith.constant dense<0.000000e+00> : vector<8xf32>
    %24 = vector.multi_reduction <add>, %23, %cst_13 [1] : vector<8x32xf32> to vector<8xf32>
    %25 = vector.shape_cast %24 : vector<8xf32> to vector<8x1xf32>
    %cst_14 = arith.constant 0.0322580636 : f32
    %26 = vector.broadcast %cst_14 : f32 to vector<8x1xf32>
    %27 = arith.mulf %25, %26 : vector<8x1xf32>
    %28 = math.sqrt %27 : vector<8x1xf32>
    %cst_15 = arith.constant 9.99999997E-7 : f32
    %29 = vector.broadcast %cst_15 : f32 to vector<8x1xf32>
    %30 = arith.addf %28, %29 : vector<8x1xf32>
    %31 = tpu.reciprocal %30 {approx = true} : vector<8x1xf32> -> vector<8x1xf32>
    %32 = vector.broadcast %20 : vector<8x1xf32> to vector<8x32xf32>
    %33 = arith.subf %16, %32 : vector<8x32xf32>
    %34 = vector.broadcast %4 : vector<1x32xf32> to vector<8x32xf32>
    %35 = arith.mulf %34, %33 : vector<8x32xf32>
    %36 = vector.broadcast %31 : vector<8x1xf32> to vector<8x32xf32>
    %37 = arith.mulf %35, %36 : vector<8x32xf32>
    %38 = vector.broadcast %5 : vector<1x32xf32> to vector<8x32xf32>
    %39 = arith.addf %37, %38 : vector<8x32xf32>
    %40 = arith.truncf %39 : vector<8x32xf32> to vector<8x32xbf16>
    %c0_16 = arith.constant 0 : index
    %c0_17 = arith.constant 0 : index
    %41 = vector.load %arg3[%c0_16, %c0_17] : memref<32x32xbf16, #tpu.memory_space<vmem>>, vector<32x32xbf16>
    %cst_18 = arith.constant dense<0.000000e+00> : vector<8x32xf32>
    %42 = tpu.matmul %40, %41, %cst_18 {dimension_numbers = #tpu.dot_dimension_numbers<[1], [0], [0], [1], [0, 0, 1, 1], [], []>} : vector<8x32xbf16>, vector<32x32xbf16>, vector<8x32xf32> -> vector<8x32xf32>
    %43 = vector.broadcast %0 : vector<1x32xf32> to vector<8x32xf32>
    %44 = arith.addf %42, %43 : vector<8x32xf32>
    %45 = vector.shape_cast %44 : vector<8x32xf32> to vector<8x4x8xf32>
    %46 = tpu.transpose %45, [1, 0, 2] : vector<8x4x8xf32> -> vector<4x8x8xf32>
    %47 = arith.truncf %46 : vector<4x8x8xf32> to vector<4x8x8xbf16>
    %c0_19 = arith.constant 0 : index
    %c0_20 = arith.constant 0 : index
    %c0_21 = arith.constant 0 : index
    %48 = vector.load %arg12[%c0_19, %c0_20, %c0_21] : memref<4x8x8xbf16, #tpu.memory_space<vmem>>, vector<4x8x8xbf16>
    %c0_22 = arith.constant 0 : index
    %c0_23 = arith.constant 0 : index
    %c0_24 = arith.constant 0 : index
    %49 = vector.load %arg13[%c0_22, %c0_23, %c0_24] : memref<4x8x8xbf16, #tpu.memory_space<vmem>>, vector<4x8x8xbf16>
    %cst_25 = arith.constant dense<0.000000e+00> : vector<4x8x8xf32>
    %50 = tpu.matmul %47, %48, %cst_25 {dimension_numbers = #tpu.dot_dimension_numbers<[2], [2], [1], [1], [0, 0, 0, 1, 1, 1], [0], [0]>} : vector<4x8x8xbf16>, vector<4x8x8xbf16>, vector<4x8x8xf32> -> vector<4x8x8xf32>
    %cst_26 = arith.constant 0.353553385 : f32
    %51 = vector.broadcast %cst_26 : f32 to vector<4x8x8xf32>
    %52 = arith.mulf %50, %51 : vector<4x8x8xf32>
    %cst_27 = arith.constant dense<0xFF800000> : vector<4x8xf32>
    %53 = vector.multi_reduction <maximumf>, %52, %cst_27 [2] : vector<4x8x8xf32> to vector<4x8xf32>
    %54 = vector.shape_cast %53 : vector<4x8xf32> to vector<4x8x1xf32>
    %55 = vector.broadcast %54 : vector<4x8x1xf32> to vector<4x8x8xf32>
    %56 = arith.subf %52, %55 : vector<4x8x8xf32>
    %57 = math.exp %56 : vector<4x8x8xf32>
    %cst_28 = arith.constant dense<0.000000e+00> : vector<4x8xf32>
    %58 = vector.multi_reduction <add>, %57, %cst_28 [2] : vector<4x8x8xf32> to vector<4x8xf32>
    %59 = vector.shape_cast %58 : vector<4x8xf32> to vector<4x8x1xf32>
    %60 = tpu.reciprocal %59 {approx = true} : vector<4x8x1xf32> -> vector<4x8x1xf32>
    %61 = vector.broadcast %60 : vector<4x8x1xf32> to vector<4x8x8xf32>
    %62 = arith.mulf %57, %61 : vector<4x8x8xf32>
    %63 = arith.truncf %62 : vector<4x8x8xf32> to vector<4x8x8xbf16>
    %cst_29 = arith.constant dense<0.000000e+00> : vector<4x8x8xf32>
    %64 = tpu.matmul %63, %49, %cst_29 {dimension_numbers = #tpu.dot_dimension_numbers<[2], [1], [1], [2], [0, 0, 0, 1, 1, 2], [0], [0]>} : vector<4x8x8xbf16>, vector<4x8x8xbf16>, vector<4x8x8xf32> -> vector<4x8x8xf32>
    %65 = tpu.transpose %64, [1, 0, 2] : vector<4x8x8xf32> -> vector<8x4x8xf32>
    %66 = vector.shape_cast %65 : vector<8x4x8xf32> to vector<8x32xf32>
    %67 = arith.truncf %66 : vector<8x32xf32> to vector<8x32xbf16>
    %c0_30 = arith.constant 0 : index
    %c0_31 = arith.constant 0 : index
    %68 = vector.load %arg6[%c0_30, %c0_31] : memref<32x32xbf16, #tpu.memory_space<vmem>>, vector<32x32xbf16>
    %cst_32 = arith.constant dense<0.000000e+00> : vector<8x32xf32>
    %69 = tpu.matmul %67, %68, %cst_32 {dimension_numbers = #tpu.dot_dimension_numbers<[1], [0], [0], [1], [0, 0, 1, 1], [], []>} : vector<8x32xbf16>, vector<32x32xbf16>, vector<8x32xf32> -> vector<8x32xf32>
    %70 = vector.broadcast %3 : vector<1x32xf32> to vector<8x32xf32>
    %71 = arith.addf %69, %70 : vector<8x32xf32>
    %72 = arith.addf %16, %71 : vector<8x32xf32>
    %cst_33 = arith.constant dense<0.000000e+00> : vector<8xf32>
    %73 = vector.multi_reduction <add>, %72, %cst_33 [1] : vector<8x32xf32> to vector<8xf32>
    %74 = vector.shape_cast %73 : vector<8xf32> to vector<8x1xf32>
    %cst_34 = arith.constant 3.200000e+01 : f32
    %75 = vector.broadcast %cst_34 : f32 to vector<8x1xf32>
    %76 = arith.divf %74, %75 : vector<8x1xf32>
    %77 = vector.broadcast %76 : vector<8x1xf32> to vector<8x32xf32>
    %78 = arith.subf %72, %77 : vector<8x32xf32>
    %79 = arith.mulf %78, %78 : vector<8x32xf32>
    %cst_35 = arith.constant dense<0.000000e+00> : vector<8xf32>
    %80 = vector.multi_reduction <add>, %79, %cst_35 [1] : vector<8x32xf32> to vector<8xf32>
    %81 = vector.shape_cast %80 : vector<8xf32> to vector<8x1xf32>
    %cst_36 = arith.constant 0.0322580636 : f32
    %82 = vector.broadcast %cst_36 : f32 to vector<8x1xf32>
    %83 = arith.mulf %81, %82 : vector<8x1xf32>
    %84 = math.sqrt %83 : vector<8x1xf32>
    %cst_37 = arith.constant 9.99999997E-7 : f32
    %85 = vector.broadcast %cst_37 : f32 to vector<8x1xf32>
    %86 = arith.addf %84, %85 : vector<8x1xf32>
    %87 = tpu.reciprocal %86 {approx = true} : vector<8x1xf32> -> vector<8x1xf32>
    %88 = vector.broadcast %76 : vector<8x1xf32> to vector<8x32xf32>
    %89 = arith.subf %72, %88 : vector<8x32xf32>
    %90 = vector.broadcast %6 : vector<1x32xf32> to vector<8x32xf32>
    %91 = arith.mulf %90, %89 : vector<8x32xf32>
    %92 = vector.broadcast %87 : vector<8x1xf32> to vector<8x32xf32>
    %93 = arith.mulf %91, %92 : vector<8x32xf32>
    %94 = vector.broadcast %7 : vector<1x32xf32> to vector<8x32xf32>
    %95 = arith.addf %93, %94 : vector<8x32xf32>
    %96 = arith.truncf %95 : vector<8x32xf32> to vector<8x32xbf16>
    %c0_38 = arith.constant 0 : index
    %c0_39 = arith.constant 0 : index
    %97 = vector.load %arg7[%c0_38, %c0_39] : memref<32x128xbf16, #tpu.memory_space<vmem>>, vector<32x128xbf16>
    %cst_40 = arith.constant dense<0.000000e+00> : vector<8x128xf32>
    %98 = tpu.matmul %96, %97, %cst_40 {dimension_numbers = #tpu.dot_dimension_numbers<[1], [0], [0], [1], [0, 0, 1, 1], [], []>} : vector<8x32xbf16>, vector<32x128xbf16>, vector<8x128xf32> -> vector<8x128xf32>
    %c0_41 = arith.constant 0 : index
    %c0_42 = arith.constant 0 : index
    %99 = vector.load %arg10[%c0_41, %c0_42] : memref<1x128xf32, #tpu.memory_space<vmem>>, vector<1x128xf32>
    %100 = vector.broadcast %99 : vector<1x128xf32> to vector<8x128xf32>
    %101 = arith.addf %98, %100 : vector<8x128xf32>
    %cst_43 = arith.constant 5.000000e-01 : f32
    %102 = vector.broadcast %cst_43 : f32 to vector<8x128xf32>
    %103 = arith.mulf %102, %101 : vector<8x128xf32>
    %cst_44 = arith.constant 4.471500e-02 : f32
    %104 = vector.broadcast %cst_44 : f32 to vector<8x128xf32>
    %105 = arith.mulf %104, %101 : vector<8x128xf32>
    %106 = arith.mulf %105, %101 : vector<8x128xf32>
    %107 = arith.mulf %106, %101 : vector<8x128xf32>
    %108 = arith.addf %101, %107 : vector<8x128xf32>
    %cst_45 = arith.constant 0.797884583 : f32
    %109 = vector.broadcast %cst_45 : f32 to vector<8x128xf32>
    %110 = arith.mulf %109, %108 : vector<8x128xf32>
    %111 = math.tanh %110 : vector<8x128xf32>
    %cst_46 = arith.constant 1.000000e+00 : f32
    %112 = vector.broadcast %cst_46 : f32 to vector<8x128xf32>
    %113 = arith.addf %112, %111 : vector<8x128xf32>
    %114 = arith.mulf %103, %113 : vector<8x128xf32>
    %115 = arith.truncf %114 : vector<8x128xf32> to vector<8x128xbf16>
    %c0_47 = arith.constant 0 : index
    %c0_48 = arith.constant 0 : index
    %116 = vector.load %arg8[%c0_47, %c0_48] : memref<128x32xbf16, #tpu.memory_space<vmem>>, vector<128x32xbf16>
    %cst_49 = arith.constant dense<0.000000e+00> : vector<8x32xf32>
    %117 = tpu.matmul %115, %116, %cst_49 {dimension_numbers = #tpu.dot_dimension_numbers<[1], [0], [0], [1], [0, 0, 1, 1], [], []>} : vector<8x128xbf16>, vector<128x32xbf16>, vector<8x32xf32> -> vector<8x32xf32>
    %118 = vector.broadcast %8 : vector<1x32xf32> to vector<8x32xf32>
    %119 = arith.addf %117, %118 : vector<8x32xf32>
    %120 = arith.addf %72, %119 : vector<8x32xf32>
    %c0_50 = arith.constant 0 : index
    %c0_51 = arith.constant 0 : index
    %c0_52 = arith.constant 0 : index
    %121 = vector.load %arg11[%c0_50, %c0_51, %c0_52] : memref<1x8x32xf32, #tpu.memory_space<vmem>>, vector<1x8x32xf32>
    %122 = vector.shape_cast %121 : vector<1x8x32xf32> to vector<8x32xf32>
    %123 = vector.shape_cast %120 : vector<8x32xf32> to vector<1x8x32xf32>
    tpu.vector_store %arg11[%c0_50, %c0_51, %c0_52], %123 {strides = array<i32>} : memref<1x8x32xf32, #tpu.memory_space<vmem>>, vector<1x8x32xf32>,
    return
  }
  func.func @transform_0(%arg0: i32, %arg1: i32) -> (i32, i32, i32) {
    %c0_i32 = arith.constant 0 : i32
    %c0_i32_0 = arith.constant 0 : i32
    %c0_i32_1 = arith.constant 0 : i32
    return %arg0, %c0_i32, %c0_i32_0 : i32, i32, i32
  }
  func.func @transform_1(%arg0: i32, %arg1: i32) -> (i32, i32) {
    %c0_i32 = arith.constant 0 : i32
    %c0_i32_0 = arith.constant 0 : i32
    %c0_i32_1 = arith.constant 0 : i32
    return %c0_i32, %c0_i32_0 : i32, i32
  }
  func.func @transform_2(%arg0: i32, %arg1: i32) -> (i32, i32) {
    %c0_i32 = arith.constant 0 : i32
    %c0_i32_0 = arith.constant 0 : i32
    %c0_i32_1 = arith.constant 0 : i32
    return %c0_i32, %c0_i32_0 : i32, i32
  }
  func.func @transform_3(%arg0: i32, %arg1: i32) -> (i32, i32) {
    %c0_i32 = arith.constant 0 : i32
    %c0_i32_0 = arith.constant 0 : i32
    %c0_i32_1 = arith.constant 0 : i32
    return %c0_i32, %c0_i32_0 : i32, i32
  }
  func.func @transform_4(%arg0: i32, %arg1: i32) -> (i32, i32) {
    %c0_i32 = arith.constant 0 : i32
    %c0_i32_0 = arith.constant 0 : i32
    %c0_i32_1 = arith.constant 0 : i32
    return %c0_i32, %c0_i32_0 : i32, i32
  }
  func.func @transform_5(%arg0: i32, %arg1: i32) -> (i32, i32) {
    %c0_i32 = arith.constant 0 : i32
    %c0_i32_0 = arith.constant 0 : i32
    %c0_i32_1 = arith.constant 0 : i32
    return %c0_i32, %c0_i32_0 : i32, i32
  }
  func.func @transform_6(%arg0: i32, %arg1: i32) -> (i32, i32) {
    %c0_i32 = arith.constant 0 : i32
    %c0_i32_0 = arith.constant 0 : i32
    %c0_i32_1 = arith.constant 0 : i32
    return %c0_i32, %c0_i32_0 : i32, i32
  }
  func.func @transform_7(%arg0: i32, %arg1: i32) -> (i32, i32) {
    %c0_i32 = arith.constant 0 : i32
    %c0_i32_0 = arith.constant 0 : i32
    %c0_i32_1 = arith.constant 0 : i32
    return %c0_i32, %c0_i32_0 : i32, i32
  }
  func.func @transform_8(%arg0: i32, %arg1: i32) -> (i32, i32) {
    %c0_i32 = arith.constant 0 : i32
    %c0_i32_0 = arith.constant 0 : i32
    %c0_i32_1 = arith.constant 0 : i32
    return %c0_i32, %c0_i32_0 : i32, i32
  }
  func.func @transform_9(%arg0: i32, %arg1: i32) -> (i32, i32, i32) {
    %c0_i32 = arith.constant 0 : i32
    %c0_i32_0 = arith.constant 0 : i32
    return %arg0, %arg1, %c0_i32 : i32, i32, i32
  }
}

</mosaic_0001>

<llo_original>
// kernel: tpu_custom_call.1
$region0: #{tpu_custom_call.1}
  #allocation0 [shape = 'u32[]', space=smem, size = 0x4, offset = 0x4, fixed_abs, tag = 'smem constant byte address 0x4 - core index']
  #allocation1 [shape = 'u32[144,128]{1,0:T(1,128)}', space=vmem, size = 0x12000, scoped, tag = 'internal scratch']
  #allocation2 [shape = 'bf16[4,8,8]{2,1,0:T(8,128)(2,1)}', space=vmem, size = 0x2000, scoped, tag = 'scratch operand']
  #allocation3 [shape = 'bf16[4,8,8]{2,1,0:T(8,128)(2,1)}', space=vmem, size = 0x2000, scoped, tag = 'scratch operand']
  %s0 = inlined_call_operand.hbm [shape: f32[2,8,32], index: 0, kind: input, shape index: {}]
  %s1 = inlined_call_operand.hbm [shape: bf16[32,32], index: 1, kind: input, shape index: {}]
  %s2 = inlined_call_operand.hbm [shape: bf16[32,32], index: 2, kind: input, shape index: {}]
  %s3 = inlined_call_operand.hbm [shape: bf16[32,32], index: 3, kind: input, shape index: {}]
  %s4 = inlined_call_operand.hbm [shape: bf16[32,32], index: 4, kind: input, shape index: {}]
  %s5 = inlined_call_operand.hbm [shape: bf16[32,128], index: 5, kind: input, shape index: {}]
  %s6 = inlined_call_operand.hbm [shape: bf16[128,32], index: 6, kind: input, shape index: {}]
  %s7 = inlined_call_operand.hbm [shape: f32[9,32], index: 7, kind: input, shape index: {}]
  %s8 = inlined_call_operand.hbm [shape: f32[1,128], index: 8, kind: input, shape index: {}]
  %s9 = inlined_call_operand.hbm [shape: f32[2,8,32], index: 9, kind: output, shape index: {}]
  %s10 = sld [smem:[#allocation0]]
  $region109: #{tpu_custom_call.1} parent=0
    _
  %s12 = ssub.s32 1, %s10
  %s13 = scalar_select 0, %s12, %s10
  $region1: #{tpu_custom_call.1} parent=0
    #allocation4 [shape = 'u8[8192]{0}', space=vmem, size = 0x2000, scoped, tag = 'input window, operand 0']
    #allocation5 [shape = 's32[2]{0}', space=sflag, size = 0x8, scoped, tag = 'scoped memory for tpu_custom_call.1']
    #allocation6 [shape = 's32[2]{0}', space=sflag, size = 0x8, scoped, tag = 'scoped memory for tpu_custom_call.1']
    #allocation7 [shape = 'u8[8192]{0}', space=vmem, size = 0x2000, scoped, tag = 'input window, operand 1, single buffered']
    #allocation8 [shape = 's32[1]{0}', space=sflag, size = 0x4, scoped, tag = 'scoped memory for tpu_custom_call.1']
    #allocation9 [shape = 'u8[8192]{0}', space=vmem, size = 0x2000, scoped, tag = 'input window, operand 2, single buffered']
    #allocation10 [shape = 'u8[8192]{0}', space=vmem, size = 0x2000, scoped, tag = 'input window, operand 3, single buffered']
    #allocation11 [shape = 's32[1]{0}', space=sflag, size = 0x4, scoped, tag = 'scoped memory for tpu_custom_call.1']
    #allocation12 [shape = 'u8[8192]{0}', space=vmem, size = 0x2000, scoped, tag = 'input window, operand 4, single buffered']
    #allocation13 [shape = 'u8[8192]{0}', space=vmem, size = 0x2000, scoped, tag = 'input window, operand 5, single buffered']
    #allocation14 [shape = 's32[1]{0}', space=sflag, size = 0x4, scoped, tag = 'scoped memory for tpu_custom_call.1']
    #allocation15 [shape = 'u8[32768]{0}', space=vmem, size = 0x8000, scoped, tag = 'input window, operand 6, single buffered']
    #allocation16 [shape = 'u8[8192]{0}', space=vmem, size = 0x2000, scoped, tag = 'input window, operand 7, single buffered']
    #allocation17 [shape = 's32[1]{0}', space=sflag, size = 0x4, scoped, tag = 'scoped memory for tpu_custom_call.1']
    #allocation18 [shape = 'u8[512]{0}', space=vmem, size = 0x400, scoped, tag = 'input window, operand 8, single buffered']
    #allocation19 [shape = 'u8[8192]{0}', space=vmem, size = 0x2000, scoped, tag = 'output window, operand 0']
    %14 = vsyncpa [#allocation5], 0
    %s15 = scalar_lea.sflag [#allocation5], 1
    %16 = vsyncpa %s15, 0
    %17 = vsyncpa [#allocation8], 0
    %18 = vsyncpa [#allocation11], 0
    %19 = vsyncpa [#allocation14], 0
    %20 = vsyncpa [#allocation17], 0
    %21 = vsyncpa [#allocation6], 0
    %s22 = scalar_lea.sflag [#allocation6], 1
    %23 = vsyncpa %s22, 0
    loop: start=0, step=1, limit=4
    $region2: #{tpu_custom_call.1} parent=1 // loop_pre_header
      _
    $region3: #{tpu_custom_call.1} parent=1 // loop_header
      %s25 = sphi 0, %s29
      %p26 = scmp.ge.s32.totalorder %s25, 4
      %s32 = sphi 0, %s44
      %s33 = sphi 0, %s40
      %s34 = sphi 0, %s32
      %s35 = sphi 0, %s33
      %s36 = sphi 0, %s34
      %s37 = sphi 0, %s35
      %s47 = sphi 0, %s49
      %s50 = sphi 0, %s47
      %s51 = sphi 0, %s50
      %s67 = sphi 0, %s51
      %s71 = sphi 0, %s71
      %s73 = sphi 0, %s71
      %s74 = sphi 0, %s73
      %s88 = sphi 0, %s74
      %s92 = sphi 0, %s92
      %s94 = sphi 0, %s92
      %s95 = sphi 0, %s94
      %s109 = sphi 0, %s95
      %s113 = sphi 0, %s113
      %s115 = sphi 0, %s113
      %s116 = sphi 0, %s115
      %s130 = sphi 0, %s116
      %s134 = sphi 0, %s134
      %s136 = sphi 0, %s134
      %s137 = sphi 0, %s136
      %s151 = sphi 0, %s137
      %s155 = sphi 0, %s155
      %s157 = sphi 0, %s155
      %s158 = sphi 0, %s157
      %s172 = sphi 0, %s158
      %s176 = sphi 0, %s176
      %s178 = sphi 0, %s176
      %s179 = sphi 0, %s178
      %s193 = sphi 0, %s179
      %s197 = sphi 0, %s197
      %s199 = sphi 0, %s197
      %s200 = sphi 0, %s199
      %s214 = sphi 0, %s200
      %s218 = sphi 0, %s218
      %s220 = sphi 0, %s218
      %s221 = sphi 0, %s220
      %s235 = sphi 0, %s221
      %s243 = sphi 0, %s245
      %s246 = sphi 0, %s243
      %s247 = sphi 0, %s246
      %s263 = sphi 0, %s247
    $region4: #{tpu_custom_call.1} parent=1 // loop_header_branch
      %28 = sbr.rel (%p26) target = $region8
    $region5: #{tpu_custom_call.1} parent=1 // loop_body
      %s30 = ssub.s32 %s25, 1
      %s31 = ssub.s32 %s25, 2
      %s38 = sadd.s32 1, %s33
      %p39 = scmp.ge.s32.totalorder %s38, 1
      %s40 = scalar_select %p39, 0, %s38
      %s41 = sadd.s32 1, %s32
      %s42 = scalar_select %p39, %s41, %s32
      %p43 = scmp.ge.s32.totalorder %s42, 2
      %s44 = scalar_select %p43, 0, %s42
      %s45 = ssub.s32 %s32, %s44
      %p46 = scmp.eq.s32.totalorder %s45, 0
      %s48 = sadd.s32 %s47, 1
      %s49 = scalar_select %p46, %s47, %s48
      %p52 = pneg %p46
      %p53 = scmp.eq.s32.totalorder %s25, 1
      %p54 = por %p52, %p53
      %p55 = scmp.ne.s32.totalorder %s47, %s50
      %p56 = scmp.eq.s32.totalorder %s25, 0
      %p57 = por %p55, %p56
      %p58 = scmp.ne.s32.totalorder %s47, %s50
      %p59 = scmp.eq.s32.totalorder %s30, 1
      %p60 = por %p58, %p59
      %p61 = scmp.ne.s32.totalorder %s50, %s51
      %p62 = scmp.eq.s32.totalorder %s30, 0
      %p63 = por %p61, %p62
      %p64 = scmp.ne.s32.totalorder %s50, %s51
      %p65 = scmp.eq.s32.totalorder %s31, 1
      %p66 = por %p64, %p65
      %p68 = scmp.ne.s32.totalorder %s51, %s67
      %p69 = scmp.eq.s32.totalorder %s31, 0
      %p70 = por %p68, %p69
      %s72 = sadd.s32 %s71, 1
      %p75 = scmp.eq.s32.totalorder %s25, 1
      %p76 = scmp.ne.s32.totalorder %s71, %s73
      %p77 = scmp.eq.s32.totalorder %s25, 0
      %p78 = por %p76, %p77
      %p79 = scmp.ne.s32.totalorder %s71, %s73
      %p80 = scmp.eq.s32.totalorder %s30, 1
      %p81 = por %p79, %p80
      %p82 = scmp.ne.s32.totalorder %s73, %s74
      %p83 = scmp.eq.s32.totalorder %s30, 0
      %p84 = por %p82, %p83
      %p85 = scmp.ne.s32.totalorder %s73, %s74
      %p86 = scmp.eq.s32.totalorder %s31, 1
      %p87 = por %p85, %p86
      %p89 = scmp.ne.s32.totalorder %s74, %s88
      %p90 = scmp.eq.s32.totalorder %s31, 0
      %p91 = por %p89, %p90
      %s93 = sadd.s32 %s92, 1
      %p96 = scmp.eq.s32.totalorder %s25, 1
      %p97 = scmp.ne.s32.totalorder %s92, %s94
      %p98 = scmp.eq.s32.totalorder %s25, 0
      %p99 = por %p97, %p98
      %p100 = scmp.ne.s32.totalorder %s92, %s94
      %p101 = scmp.eq.s32.totalorder %s30, 1
      %p102 = por %p100, %p101
      %p103 = scmp.ne.s32.totalorder %s94, %s95
      %p104 = scmp.eq.s32.totalorder %s30, 0
      %p105 = por %p103, %p104
      %p106 = scmp.ne.s32.totalorder %s94, %s95
      %p107 = scmp.eq.s32.totalorder %s31, 1
      %p108 = por %p106, %p107
      %p110 = scmp.ne.s32.totalorder %s95, %s109
      %p111 = scmp.eq.s32.totalorder %s31, 0
      %p112 = por %p110, %p111
      %s114 = sadd.s32 %s113, 1
      %p117 = scmp.eq.s32.totalorder %s25, 1
      %p118 = scmp.ne.s32.totalorder %s113, %s115
      %p119 = scmp.eq.s32.totalorder %s25, 0
      %p120 = por %p118, %p119
      %p121 = scmp.ne.s32.totalorder %s113, %s115
      %p122 = scmp.eq.s32.totalorder %s30, 1
      %p123 = por %p121, %p122
      %p124 = scmp.ne.s32.totalorder %s115, %s116
      %p125 = scmp.eq.s32.totalorder %s30, 0
      %p126 = por %p124, %p125
      %p127 = scmp.ne.s32.totalorder %s115, %s116
      %p128 = scmp.eq.s32.totalorder %s31, 1
      %p129 = por %p127, %p128
      %p131 = scmp.ne.s32.totalorder %s116, %s130
      %p132 = scmp.eq.s32.totalorder %s31, 0
      %p133 = por %p131, %p132
      %s135 = sadd.s32 %s134, 1
      %p138 = scmp.eq.s32.totalorder %s25, 1
      %p139 = scmp.ne.s32.totalorder %s134, %s136
      %p140 = scmp.eq.s32.totalorder %s25, 0
      %p141 = por %p139, %p140
      %p142 = scmp.ne.s32.totalorder %s134, %s136
      %p143 = scmp.eq.s32.totalorder %s30, 1
      %p144 = por %p142, %p143
      %p145 = scmp.ne.s32.totalorder %s136, %s137
      %p146 = scmp.eq.s32.totalorder %s30, 0
      %p147 = por %p145, %p146
      %p148 = scmp.ne.s32.totalorder %s136, %s137
      %p149 = scmp.eq.s32.totalorder %s31, 1
      %p150 = por %p148, %p149
      %p152 = scmp.ne.s32.totalorder %s137, %s151
      %p153 = scmp.eq.s32.totalorder %s31, 0
      %p154 = por %p152, %p153
      %s156 = sadd.s32 %s155, 1
      %p159 = scmp.eq.s32.totalorder %s25, 1
      %p160 = scmp.ne.s32.totalorder %s155, %s157
      %p161 = scmp.eq.s32.totalorder %s25, 0
      %p162 = por %p160, %p161
      %p163 = scmp.ne.s32.totalorder %s155, %s157
      %p164 = scmp.eq.s32.totalorder %s30, 1
      %p165 = por %p163, %p164
      %p166 = scmp.ne.s32.totalorder %s157, %s158
      %p167 = scmp.eq.s32.totalorder %s30, 0
      %p168 = por %p166, %p167
      %p169 = scmp.ne.s32.totalorder %s157, %s158
      %p170 = scmp.eq.s32.totalorder %s31, 1
      %p171 = por %p169, %p170
      %p173 = scmp.ne.s32.totalorder %s158, %s172
      %p174 = scmp.eq.s32.totalorder %s31, 0
      %p175 = por %p173, %p174
      %s177 = sadd.s32 %s176, 1
      %p180 = scmp.eq.s32.totalorder %s25, 1
      %p181 = scmp.ne.s32.totalorder %s176, %s178
      %p182 = scmp.eq.s32.totalorder %s25, 0
      %p183 = por %p181, %p182
      %p184 = scmp.ne.s32.totalorder %s176, %s178
      %p185 = scmp.eq.s32.totalorder %s30, 1
      %p186 = por %p184, %p185
      %p187 = scmp.ne.s32.totalorder %s178, %s179
      %p188 = scmp.eq.s32.totalorder %s30, 0
      %p189 = por %p187, %p188
      %p190 = scmp.ne.s32.totalorder %s178, %s179
      %p191 = scmp.eq.s32.totalorder %s31, 1
      %p192 = por %p190, %p191
      %p194 = scmp.ne.s32.totalorder %s179, %s193
      %p195 = scmp.eq.s32.totalorder %s31, 0
      %p196 = por %p194, %p195
      %s198 = sadd.s32 %s197, 1
      %p201 = scmp.eq.s32.totalorder %s25, 1
      %p202 = scmp.ne.s32.totalorder %s197, %s199
      %p203 = scmp.eq.s32.totalorder %s25, 0
      %p204 = por %p202, %p203
      %p205 = scmp.ne.s32.totalorder %s197, %s199
      %p206 = scmp.eq.s32.totalorder %s30, 1
      %p207 = por %p205, %p206
      %p208 = scmp.ne.s32.totalorder %s199, %s200
      %p209 = scmp.eq.s32.totalorder %s30, 0
      %p210 = por %p208, %p209
      %p211 = scmp.ne.s32.totalorder %s199, %s200
      %p212 = scmp.eq.s32.totalorder %s31, 1
      %p213 = por %p211, %p212
      %p215 = scmp.ne.s32.totalorder %s200, %s214
      %p216 = scmp.eq.s32.totalorder %s31, 0
      %p217 = por %p215, %p216
      %s219 = sadd.s32 %s218, 1
      %p222 = scmp.eq.s32.totalorder %s25, 1
      %p223 = scmp.ne.s32.totalorder %s218, %s220
      %p224 = scmp.eq.s32.totalorder %s25, 0
      %p225 = por %p223, %p224
      %p226 = scmp.ne.s32.totalorder %s218, %s220
      %p227 = scmp.eq.s32.totalorder %s30, 1
      %p228 = por %p226, %p227
      %p229 = scmp.ne.s32.totalorder %s220, %s221
      %p230 = scmp.eq.s32.totalorder %s30, 0
      %p231 = por %p229, %p230
      %p232 = scmp.ne.s32.totalorder %s220, %s221
      %p233 = scmp.eq.s32.totalorder %s31, 1
      %p234 = por %p232, %p233
      %p236 = scmp.ne.s32.totalorder %s221, %s235
      %p237 = scmp.eq.s32.totalorder %s31, 0
      %p238 = por %p236, %p237
      %s239 = ssub.s32 %s32, %s44
      %s240 = ssub.s32 %s33, %s40
      %s241 = sor.u32 %s239, %s240
      %p242 = scmp.eq.s32.totalorder %s241, 0
      %s244 = sadd.s32 %s243, 1
      %s245 = scalar_select %p242, %s243, %s244
      %p248 = pneg %p242
      %p249 = scmp.eq.s32.totalorder %s25, 1
      %p250 = por %p248, %p249
      %p251 = scmp.ne.s32.totalorder %s243, %s246
      %p252 = scmp.eq.s32.totalorder %s25, 0
      %p253 = por %p251, %p252
      %p254 = scmp.ne.s32.totalorder %s243, %s246
      %p255 = scmp.eq.s32.totalorder %s30, 1
      %p256 = por %p254, %p255
      %p257 = scmp.ne.s32.totalorder %s246, %s247
      %p258 = scmp.eq.s32.totalorder %s30, 0
      %p259 = por %p257, %p258
      %p260 = scmp.ne.s32.totalorder %s246, %s247
      %p261 = scmp.eq.s32.totalorder %s31, 1
      %p262 = por %p260, %p261
      %p264 = scmp.ne.s32.totalorder %s247, %s263
      %p265 = scmp.eq.s32.totalorder %s31, 0
      %p266 = por %p264, %p265
      %p267 = scmp.le.s32.totalorder 1, %s25
      %p268 = scmp.lt.s32.totalorder %s25, 3
      %p269 = pnand %p267, %p268
      %p270 = pneg %p269
      // Predicated region
      $region9: #{tpu_custom_call.1} parent=5 // pred_check
        _
      $region10: #{tpu_custom_call.1} parent=5 // pred_check_branch
        %272 = sbr.rel (%p269) target = $region12
      $region11: #{tpu_custom_call.1} parent=5 // pred_region
        %s273 = ssub.s32 %s25, 1
        // Predicated region
        $region13: #{tpu_custom_call.1} parent=11 // pred_check
          %p274 = pneg %p84
        $region14: #{tpu_custom_call.1} parent=11 // pred_check_branch
          %276 = sbr.rel (%p274) target = $region16
        $region15: #{tpu_custom_call.1} parent=11 // pred_region
          %s278 = ssub.s32 256, 256
          %279 = vsyncadd [#allocation8], %s278
          %s280 = sshll.u32 [#allocation7], 4
          %s281 = int_to_ptr.vmem [resolvable:$true] %s280
          %286 = dma.hbm_to_vmem [thread:$0]  %s1, 256, %s281, [#allocation8], 64, 64, 4
        $region16: #{tpu_custom_call.1} parent=11 // pred_fallthru
          _
        // Predicated region
        $region17: #{tpu_custom_call.1} parent=11 // pred_check
          %p287 = pneg %p105
        $region18: #{tpu_custom_call.1} parent=11 // pred_check_branch
          %289 = sbr.rel (%p287) target = $region20
        $region19: #{tpu_custom_call.1} parent=11 // pred_region
          %s291 = ssub.s32 256, 256
          %292 = vsyncadd [#allocation8], %s291
          %s293 = sshll.u32 [#allocation9], 4
          %s294 = int_to_ptr.vmem [resolvable:$true] %s293
          %299 = dma.hbm_to_vmem [thread:$0]  %s2, 256, %s294, [#allocation8], 64, 64, 4
        $region20: #{tpu_custom_call.1} parent=11 // pred_fallthru
          _
        // Predicated region
        $region21: #{tpu_custom_call.1} parent=11 // pred_check
          %p300 = pneg %p126
        $region22: #{tpu_custom_call.1} parent=11 // pred_check_branch
          %302 = sbr.rel (%p300) target = $region24
        $region23: #{tpu_custom_call.1} parent=11 // pred_region
          %s304 = ssub.s32 256, 256
          %305 = vsyncadd [#allocation11], %s304
          %s306 = sshll.u32 [#allocation10], 4
          %s307 = int_to_ptr.vmem [resolvable:$true] %s306
          %312 = dma.hbm_to_vmem [thread:$0]  %s3, 256, %s307, [#allocation11], 64, 64, 4
        $region24: #{tpu_custom_call.1} parent=11 // pred_fallthru
          _
        // Predicated region
        $region25: #{tpu_custom_call.1} parent=11 // pred_check
          %p313 = pneg %p147
        $region26: #{tpu_custom_call.1} parent=11 // pred_check_branch
          %315 = sbr.rel (%p313) target = $region28
        $region27: #{tpu_custom_call.1} parent=11 // pred_region
          %s317 = ssub.s32 256, 256
          %318 = vsyncadd [#allocation11], %s317
          %s319 = sshll.u32 [#allocation12], 4
          %s320 = int_to_ptr.vmem [resolvable:$true] %s319
          %325 = dma.hbm_to_vmem [thread:$0]  %s4, 256, %s320, [#allocation11], 64, 64, 4
        $region28: #{tpu_custom_call.1} parent=11 // pred_fallthru
          _
        // Predicated region
        $region29: #{tpu_custom_call.1} parent=11 // pred_check
          %p326 = pneg %p168
        $region30: #{tpu_custom_call.1} parent=11 // pred_check_branch
          %328 = sbr.rel (%p326) target = $region32
        $region31: #{tpu_custom_call.1} parent=11 // pred_region
          %s330 = ssub.s32 256, 256
          %331 = vsyncadd [#allocation14], %s330
          %s332 = sshll.u32 [#allocation13], 4
          %s333 = int_to_ptr.vmem [resolvable:$true] %s332
          %338 = dma.hbm_to_vmem [thread:$0]  %s5, 256, %s333, [#allocation14], 64, 64, 4
        $region32: #{tpu_custom_call.1} parent=11 // pred_fallthru
          _
        // Predicated region
        $region33: #{tpu_custom_call.1} parent=11 // pred_check
          %p339 = pneg %p189
        $region34: #{tpu_custom_call.1} parent=11 // pred_check_branch
          %341 = sbr.rel (%p339) target = $region36
        $region35: #{tpu_custom_call.1} parent=11 // pred_region
          %s343 = ssub.s32 1024, 1024
          %344 = vsyncadd [#allocation14], %s343
          %s345 = sshll.u32 [#allocation15], 4
          %s346 = int_to_ptr.vmem [resolvable:$true] %s345
          %351 = dma.hbm_to_vmem [thread:$0]  %s6, 1024, %s346, [#allocation14], 64, 64, 4
        $region36: #{tpu_custom_call.1} parent=11 // pred_fallthru
          _
        // Predicated region
        $region37: #{tpu_custom_call.1} parent=11 // pred_check
          %p352 = pneg %p210
        $region38: #{tpu_custom_call.1} parent=11 // pred_check_branch
          %354 = sbr.rel (%p352) target = $region40
        $region39: #{tpu_custom_call.1} parent=11 // pred_region
          %s356 = ssub.s32 256, 256
          %357 = vsyncadd [#allocation17], %s356
          %s358 = sshll.u32 [#allocation16], 4
          %s359 = int_to_ptr.vmem [resolvable:$true] %s358
          %364 = dma.hbm_to_vmem [thread:$0]  %s7, 256, %s359, [#allocation17], 128, 128, 8
        $region40: #{tpu_custom_call.1} parent=11 // pred_fallthru
          _
        // Predicated region
        $region41: #{tpu_custom_call.1} parent=11 // pred_check
          %p365 = pneg %p231
        $region42: #{tpu_custom_call.1} parent=11 // pred_check_branch
          %367 = sbr.rel (%p365) target = $region44
        $region43: #{tpu_custom_call.1} parent=11 // pred_region
          %s369 = ssub.s32 16, 16
          %370 = vsyncadd [#allocation17], %s369
          %s372 = sshll.u32 [#allocation18], 4
          %s373 = int_to_ptr.vmem [resolvable:$true] %s372
          %375 = dma.hbm_to_vmem [thread:$0]  %s8, 16, %s373, [#allocation17]
        $region44: #{tpu_custom_call.1} parent=11 // pred_fallthru
          _
      $region12: #{tpu_custom_call.1} parent=5 // pred_fallthru
        _
      %p376 = scmp.lt.s32.totalorder %s25, 2
      // Predicated region
      $region45: #{tpu_custom_call.1} parent=5 // pred_check
        %p377 = pneg %p376
      $region46: #{tpu_custom_call.1} parent=5 // pred_check_branch
        %379 = sbr.rel (%p377) target = $region48
      $region47: #{tpu_custom_call.1} parent=5 // pred_region
        // Predicated region
        $region49: #{tpu_custom_call.1} parent=47 // pred_check
          %p380 = pneg %p57
        $region50: #{tpu_custom_call.1} parent=47 // pred_check_branch
          %382 = sbr.rel (%p380) target = $region52
        $region51: #{tpu_custom_call.1} parent=47 // pred_region
          %s383 = sand.u32 %s47, 1
          %s384 = scalar_lea.sflag [#allocation5], %s383
          %s385 = sand.u32 %s47, 1
          %s386 = smul.addr %s385, 8
          %s387 = scalar_lea.vmem [#allocation4], %s386
          %s389 = ssub.s32 128, 128
          %390 = vsyncadd %s384, %s389
          %s391 = smul.addr %s32, 128
          %s392 = scalar_lea.hbm %s0, %s391
          %s394 = sshll.u32 %s387, 4
          %s395 = int_to_ptr.vmem [resolvable:$true] %s394
          %397 = dma.hbm_to_vmem [thread:$0]  %s392, 128, %s395, %s384
        $region52: #{tpu_custom_call.1} parent=47 // pred_fallthru
          _
      $region48: #{tpu_custom_call.1} parent=5 // pred_fallthru
        _
      %p398 = scmp.le.s32.totalorder 1, %s25
      %p399 = scmp.lt.s32.totalorder %s25, 3
      %p400 = pnand %p398, %p399
      %p401 = pneg %p400
      // Predicated region
      $region53: #{tpu_custom_call.1} parent=5 // pred_check
        _
      $region54: #{tpu_custom_call.1} parent=5 // pred_check_branch
        %403 = sbr.rel (%p400) target = $region56
      $region55: #{tpu_custom_call.1} parent=5 // pred_region
        %s404 = ssub.s32 %s25, 1
        %s405 = sand.u32 %s50, 1
        %s406 = scalar_lea.sflag [#allocation5], %s405
        %s407 = sand.u32 %s50, 1
        %s408 = smul.addr %s407, 8
        %s409 = scalar_lea.vmem [#allocation4], %s408
        // Predicated region
        $region57: #{tpu_custom_call.1} parent=55 // pred_check
          %p410 = pneg %p63
        $region58: #{tpu_custom_call.1} parent=55 // pred_check_branch
          %412 = sbr.rel (%p410) target = $region60
        $region59: #{tpu_custom_call.1} parent=55 // pred_region
          %413 = dma.done %s406, 128
        $region60: #{tpu_custom_call.1} parent=55 // pred_fallthru
          _
        // Predicated region
        $region61: #{tpu_custom_call.1} parent=55 // pred_check
          %p414 = pneg %p84
        $region62: #{tpu_custom_call.1} parent=55 // pred_check_branch
          %416 = sbr.rel (%p414) target = $region64
        $region63: #{tpu_custom_call.1} parent=55 // pred_region
          %417 = dma.done [#allocation8], 256
        $region64: #{tpu_custom_call.1} parent=55 // pred_fallthru
          _
        // Predicated region
        $region65: #{tpu_custom_call.1} parent=55 // pred_check
          %p418 = pneg %p105
        $region66: #{tpu_custom_call.1} parent=55 // pred_check_branch
          %420 = sbr.rel (%p418) target = $region68
        $region67: #{tpu_custom_call.1} parent=55 // pred_region
          %421 = dma.done [#allocation8], 256
        $region68: #{tpu_custom_call.1} parent=55 // pred_fallthru
          _
        // Predicated region
        $region69: #{tpu_custom_call.1} parent=55 // pred_check
          %p422 = pneg %p126
        $region70: #{tpu_custom_call.1} parent=55 // pred_check_branch
          %424 = sbr.rel (%p422) target = $region72
        $region71: #{tpu_custom_call.1} parent=55 // pred_region
          %425 = dma.done [#allocation11], 256
        $region72: #{tpu_custom_call.1} parent=55 // pred_fallthru
          _
        // Predicated region
        $region73: #{tpu_custom_call.1} parent=55 // pred_check
          %p426 = pneg %p147
        $region74: #{tpu_custom_call.1} parent=55 // pred_check_branch
          %428 = sbr.rel (%p426) target = $region76
        $region75: #{tpu_custom_call.1} parent=55 // pred_region
          %429 = dma.done [#allocation11], 256
        $region76: #{tpu_custom_call.1} parent=55 // pred_fallthru
          _
        // Predicated region
        $region77: #{tpu_custom_call.1} parent=55 // pred_check
          %p430 = pneg %p168
        $region78: #{tpu_custom_call.1} parent=55 // pred_check_branch
          %432 = sbr.rel (%p430) target = $region80
        $region79: #{tpu_custom_call.1} parent=55 // pred_region
          %433 = dma.done [#allocation14], 256
        $region80: #{tpu_custom_call.1} parent=55 // pred_fallthru
          _
        // Predicated region
        $region81: #{tpu_custom_call.1} parent=55 // pred_check
          %p434 = pneg %p189
        $region82: #{tpu_custom_call.1} parent=55 // pred_check_branch
          %436 = sbr.rel (%p434) target = $region84
        $region83: #{tpu_custom_call.1} parent=55 // pred_region
          %437 = dma.done [#allocation14], 1024
        $region84: #{tpu_custom_call.1} parent=55 // pred_fallthru
          _
        // Predicated region
        $region85: #{tpu_custom_call.1} parent=55 // pred_check
          %p438 = pneg %p210
        $region86: #{tpu_custom_call.1} parent=55 // pred_check_branch
          %440 = sbr.rel (%p438) target = $region88
        $region87: #{tpu_custom_call.1} parent=55 // pred_region
          %441 = dma.done [#allocation17], 256
        $region88: #{tpu_custom_call.1} parent=55 // pred_fallthru
          _
        // Predicated region
        $region89: #{tpu_custom_call.1} parent=55 // pred_check
          %p442 = pneg %p231
        $region90: #{tpu_custom_call.1} parent=55 // pred_check_branch
          %444 = sbr.rel (%p442) target = $region92
        $region91: #{tpu_custom_call.1} parent=55 // pred_region
          %445 = dma.done [#allocation17], 16
        $region92: #{tpu_custom_call.1} parent=55 // pred_fallthru
          _
        %s446 = sand.u32 %s50, 1
        %s447 = scalar_lea.sflag [#allocation5], %s446
        %s448 = sand.u32 %s50, 1
        %s449 = smul.addr %s448, 8
        %s450 = scalar_lea.vmem [#allocation4], %s449
        %p451 = pneg %p63
        %p452 = pneg %p60
        %p453 = pneg %p84
        %p454 = pneg %p81
        %p455 = pneg %p105
        %p456 = pneg %p102
        %p457 = pneg %p126
        %p458 = pneg %p123
        %p459 = pneg %p147
        %p460 = pneg %p144
        %p461 = pneg %p168
        %p462 = pneg %p165
        %p463 = pneg %p189
        %p464 = pneg %p186
        %p465 = pneg %p210
        %p466 = pneg %p207
        %p467 = pneg %p231
        %p468 = pneg %p228
        %p469 = pneg %p259
        %p470 = pneg %p256
        %s471 = sand.u32 %s246, 1
        %s472 = scalar_lea.sflag [#allocation6], %s471
        %s473 = sand.u32 %s246, 1
        %s474 = smul.addr %s473, 8
        %s475 = scalar_lea.vmem [#allocation19], %s474
        %v477 = vld [vmem:[#allocation16] sm:$0x1]
        %v478 = vld [vmem:[#allocation16 + $0x1] sm:$0x1]
        %v479 = vld [vmem:[#allocation16 + $0x2] sm:$0x1]
        %v480 = vld [vmem:[#allocation16 + $0x3] sm:$0x1]
        %v481 = vld [vmem:[#allocation16 + $0x4] sm:$0x1]
        %v482 = vld [vmem:[#allocation16 + $0x5] sm:$0x1]
        %v483 = vld [vmem:[#allocation16 + $0x6] sm:$0x1]
        %v484 = vld [vmem:[#allocation16 + $0x7] sm:$0x1]
        %v485 = vld [vmem:[#allocation16 + $0x8] sm:$0x1]
        %p486 = scmp.eq.s32.totalorder %s35, 0
        // Predicated region
        $region93: #{tpu_custom_call.1} parent=55 // pred_check
          %p487 = pneg %p486
        $region94: #{tpu_custom_call.1} parent=55 // pred_check_branch
          %489 = sbr.rel (%p487) target = $region96
        $region95: #{tpu_custom_call.1} parent=55 // pred_region
          %v490 = vld [vmem:[%s409] sm:$0xff]
          %vm491 = vcmask 261120
          %v492 = vsel %vm491, %v490, 0.0
          %493 = vadd.xlane.f32.xlu0 %v492
          %v494 = vpop.xlane.xlu0 %493
          %v495 = vrcp.pop 32.0
          %v496 = vmul.f32 %v494, %v495
          %v497 = vsub.f32 %v490, %v496
          %v498 = vmul.f32 %v497, %v497
          %v499 = vsel %vm491, %v498, 0.0
          %500 = vadd.xlane.f32.xlu0 %v499
          %v501 = vpop.xlane.xlu0 %500
          %v502 = vmul.f32 %v501, 0.032258064
          %v503 = vrsqrt.pop %v502
          %v504 = vmul.f32 %v502, %v503
          %vm505 = vcmp.eq.f32.partialorder %v502, inf
          %v506 = vsel %vm505, %v502, %v504
          %vm507 = vcmp.eq.f32.partialorder %v502, 0.0
          %v508 = vand.u32 %v502, 2147483648
          %v509 = vsel %vm507, %v508, %v506
          %v510 = vadd.f32 %v509, 1e-06
          %v511 = vrcp.pop %v510
          %v512 = vlaneseq
          %v513 = vshrl.u32 %v512, 7
          %v514 = vsub.s32 0, %v513
          %v515 = vrot.slane %v481, %v514
          %v516 = vmul.f32 %v515, %v497
          %v517 = vmul.f32 %v516, %v511
          %v518 = vlaneseq
          %v519 = vshrl.u32 %v518, 7
          %v520 = vsub.s32 0, %v519
          %v521 = vrot.slane %v482, %v520
          %v522 = vadd.f32 %v517, %v521
          %v523 = vpack.c.bf16 %v522, %v522
          %v524 = vld [vmem:[#allocation9] sm:$0xf]
          %v525 = vld [vmem:[#allocation9 + $0x4] sm:$0xf]
          %v526 = vld [vmem:[#allocation9 + $0x8] sm:$0xf]
          %v527 = vld [vmem:[#allocation9 + $0xc] sm:$0xf]
          %v528 = vlaneseq
          %v529 = vshrl.u32 %v528, 7
          %v530 = vsub.s32 0, %v529
          %v531 = vrot.slane %v478, %v530
          %v536 = vunpack.c.l.b16 %v524
          %v537 = vunpack.c.l.b16 %v525
          %v538 = vunpack.c.l.b16 %v526
          %v539 = vunpack.c.l.b16 %v527
          %v540 = vpack.c.b16 %v537, %v536
          %v541 = vpack.c.b16 %v539, %v538
          %v545 = vsel %vm491, %v523, 0
          %547 = vmatprep.subr.bf16.mxu0 0
          %548 = vmatpush1.bf16.msra.mxu0 %v540
          %549 = vmatprep.subr.bf16.mxu0 0
          %550 = vmatpush1.bf16.msra.mxu0 %v541
          %551 = vmatprep.subr.bf16.mxu0 0
          %552 = vmatpush1.bf16.msra.mxu0 0
          %553 = vmatprep.subr.bf16.mxu0 0
          %554 = vmatpush1.bf16.msra.mxu0 0
          %555 = vmatprep.subr.bf16.mxu0 0
          %556 = vmatpush1.bf16.msra.mxu0 0
          %557 = vmatprep.subr.bf16.mxu0 0
          %558 = vmatpush1.bf16.msra.mxu0 0
          %559 = vmatprep.subr.bf16.mxu0 0
          %560 = vmatpush1.bf16.msra.mxu0 0
          %561 = vmatprep.subr.bf16.mxu0 0
          %562 = vmatpush1.bf16.msra.mxu0 0
          %563 = vmatprep.subr.bf16.mxu0 0
          %564 = vmatpush1.bf16.msra.mxu0 0
          %565 = vmatprep.subr.bf16.mxu0 0
          %566 = vmatpush1.bf16.msra.mxu0 0
          %567 = vmatprep.subr.bf16.mxu0 0
          %568 = vmatpush1.bf16.msra.mxu0 0
          %569 = vmatprep.subr.bf16.mxu0 0
          %570 = vmatpush1.bf16.msra.mxu0 0
          %571 = vmatprep.subr.bf16.mxu0 0
          %572 = vmatpush1.bf16.msra.mxu0 0
          %573 = vmatprep.subr.bf16.mxu0 0
          %574 = vmatpush1.bf16.msra.mxu0 0
          %575 = vmatprep.subr.bf16.mxu0 0
          %576 = vmatpush1.bf16.msra.mxu0 0
          %577 = vmatprep.subr.bf16.mxu0 0
          %578 = vmatpush1.bf16.msra.mxu0 0
          %579 = vmatprep.mubr.bf16.mxu0 0
          %580 = vmatmul.mubr.bf16.gmra.mrb[0].mxu0 %v545
          %v581 = vpop.f32.mrb[0].mxu0
          %v582 = vadd.f32 %v531, %v581
          %v583 = vpop.f32.mrb[0].mxu0
          %v584 = vpop.f32.mrb[0].mxu0
          %v585 = vpop.f32.mrb[0].mxu0
          %586 = vdwg.mxu0
          %v587 = vld [vmem:[#allocation10] sm:$0xf]
          %v588 = vld [vmem:[#allocation10 + $0x4] sm:$0xf]
          %v589 = vld [vmem:[#allocation10 + $0x8] sm:$0xf]
          %v590 = vld [vmem:[#allocation10 + $0xc] sm:$0xf]
          %v591 = vlaneseq
          %v592 = vshrl.u32 %v591, 7
          %v593 = vsub.s32 0, %v592
          %v594 = vrot.slane %v479, %v593
          %v599 = vunpack.c.l.b16 %v587
          %v600 = vunpack.c.l.b16 %v588
          %v601 = vunpack.c.l.b16 %v589
          %v602 = vunpack.c.l.b16 %v590
          %v603 = vpack.c.b16 %v600, %v599
          %v604 = vpack.c.b16 %v602, %v601
          %607 = vmatprep.subr.bf16.mxu0 0
          %608 = vmatpush1.bf16.msra.mxu0 %v603
          %609 = vmatprep.subr.bf16.mxu0 0
          %610 = vmatpush1.bf16.msra.mxu0 %v604
          %611 = vmatprep.subr.bf16.mxu0 0
          %612 = vmatpush1.bf16.msra.mxu0 0
          %613 = vmatprep.subr.bf16.mxu0 0
          %614 = vmatpush1.bf16.msra.mxu0 0
          %615 = vmatprep.subr.bf16.mxu0 0
          %616 = vmatpush1.bf16.msra.mxu0 0
          %617 = vmatprep.subr.bf16.mxu0 0
          %618 = vmatpush1.bf16.msra.mxu0 0
          %619 = vmatprep.subr.bf16.mxu0 0
          %620 = vmatpush1.bf16.msra.mxu0 0
          %621 = vmatprep.subr.bf16.mxu0 0
          %622 = vmatpush1.bf16.msra.mxu0 0
          %623 = vmatprep.subr.bf16.mxu0 0
          %624 = vmatpush1.bf16.msra.mxu0 0
          %625 = vmatprep.subr.bf16.mxu0 0
          %626 = vmatpush1.bf16.msra.mxu0 0
          %627 = vmatprep.subr.bf16.mxu0 0
          %628 = vmatpush1.bf16.msra.mxu0 0
          %629 = vmatprep.subr.bf16.mxu0 0
          %630 = vmatpush1.bf16.msra.mxu0 0
          %631 = vmatprep.subr.bf16.mxu0 0
          %632 = vmatpush1.bf16.msra.mxu0 0
          %633 = vmatprep.subr.bf16.mxu0 0
          %634 = vmatpush1.bf16.msra.mxu0 0
          %635 = vmatprep.subr.bf16.mxu0 0
          %636 = vmatpush1.bf16.msra.mxu0 0
          %637 = vmatprep.subr.bf16.mxu0 0
          %638 = vmatpush1.bf16.msra.mxu0 0
          %639 = vmatprep.mubr.bf16.mxu0 0
          %640 = vmatmul.mubr.bf16.gmra.mrb[0].mxu0 %v545
          %v641 = vpop.f32.mrb[0].mxu0
          %v642 = vadd.f32 %v594, %v641
          %v643 = vpop.f32.mrb[0].mxu0
          %v644 = vpop.f32.mrb[0].mxu0
          %v645 = vpop.f32.mrb[0].mxu0
          %646 = vdwg.mxu0
          %648 = vrot.lane.b32.xlu0 %v582, 120
          %v649 = vpop.permute.xlu0 %648
          %651 = vrot.lane.b32.xlu0 %v582, 112
          %v652 = vpop.permute.xlu0 %651
          %654 = vrot.lane.b32.xlu0 %v582, 104
          %v655 = vpop.permute.xlu0 %654
          %v657 = vcombine.low %v582, %v652
          %v658 = vcombine.high %v582, %v652
          %v660 = vunpack.c.l.s4 1983009808
          %v661 = vunpack.c.0.s8 %v660
          %v662 = vlaneseq
          %v663 = vshrl.u32 %v662, 7
          %v664 = vsub.s32 %v661, %v663
          %v665 = vrot.slane %v657, %v664
          %v667 = vunpack.c.l.s4 1983009808
          %v668 = vunpack.c.0.s8 %v667
          %v669 = vlaneseq
          %v670 = vshrl.u32 %v669, 7
          %v671 = vsub.s32 %v668, %v670
          %v672 = vrot.slane %v658, %v671
          %v673 = vcombine.low %v649, %v655
          %v674 = vcombine.high %v649, %v655
          %v676 = vunpack.c.l.s4 1983009808
          %v677 = vunpack.c.0.s8 %v676
          %v678 = vlaneseq
          %v679 = vshrl.u32 %v678, 7
          %v680 = vsub.s32 %v677, %v679
          %v681 = vrot.slane %v673, %v680
          %v683 = vunpack.c.l.s4 1983009808
          %v684 = vunpack.c.0.s8 %v683
          %v685 = vlaneseq
          %v686 = vshrl.u32 %v685, 7
          %v687 = vsub.s32 %v684, %v686
          %v688 = vrot.slane %v674, %v687
          %v689 = vcombine.low %v665, %v681
          %v690 = vcombine.high %v665, %v681
          %v692 = vunpack.c.l.s4 1934713408
          %v693 = vunpack.c.0.s8 %v692
          %v694 = vlaneseq
          %v695 = vshrl.u32 %v694, 7
          %v696 = vsub.s32 %v693, %v695
          %v697 = vrot.slane %v689, %v696
          %v699 = vunpack.c.l.s4 1934713408
          %v700 = vunpack.c.0.s8 %v699
          %v701 = vlaneseq
          %v702 = vshrl.u32 %v701, 7
          %v703 = vsub.s32 %v700, %v702
          %v704 = vrot.slane %v690, %v703
          %v705 = vcombine.low %v672, %v688
          %v706 = vcombine.high %v672, %v688
          %v708 = vunpack.c.l.s4 1934713408
          %v709 = vunpack.c.0.s8 %v708
          %v710 = vlaneseq
          %v711 = vshrl.u32 %v710, 7
          %v712 = vsub.s32 %v709, %v711
          %v713 = vrot.slane %v705, %v712
          %v715 = vunpack.c.l.s4 1934713408
          %v716 = vunpack.c.0.s8 %v715
          %v717 = vlaneseq
          %v718 = vshrl.u32 %v717, 7
          %v719 = vsub.s32 %v716, %v718
          %v720 = vrot.slane %v706, %v719
          %v721 = vcombine.high %v697, 0.0
          %v722 = vcombine.high %v704, 0.0
          %v723 = vcombine.high %v713, 0.0
          %v724 = vcombine.high %v720, 0.0
          %v725 = vcombine.low %v697, %v704
          %v727 = vunpack.c.l.s4 1983009808
          %v728 = vunpack.c.0.s8 %v727
          %v729 = vlaneseq
          %v730 = vshrl.u32 %v729, 7
          %v731 = vsub.s32 %v728, %v730
          %v732 = vrot.slane %v725, %v731
          %v733 = vcombine.low %v721, %v722
          %v735 = vunpack.c.l.s4 1983009808
          %v736 = vunpack.c.0.s8 %v735
          %v737 = vlaneseq
          %v738 = vshrl.u32 %v737, 7
          %v739 = vsub.s32 %v736, %v738
          %v740 = vrot.slane %v733, %v739
          %v741 = vcombine.low %v713, %v720
          %v743 = vunpack.c.l.s4 1983009808
          %v744 = vunpack.c.0.s8 %v743
          %v745 = vlaneseq
          %v746 = vshrl.u32 %v745, 7
          %v747 = vsub.s32 %v744, %v746
          %v748 = vrot.slane %v741, %v747
          %v749 = vcombine.low %v723, %v724
          %v751 = vunpack.c.l.s4 1983009808
          %v752 = vunpack.c.0.s8 %v751
          %v753 = vlaneseq
          %v754 = vshrl.u32 %v753, 7
          %v755 = vsub.s32 %v752, %v754
          %v756 = vrot.slane %v749, %v755
          %v757 = vcombine.low %v732, %v740
          %v758 = vcombine.high %v732, %v740
          %v760 = vunpack.c.l.s4 1934713408
          %v761 = vunpack.c.0.s8 %v760
          %v762 = vlaneseq
          %v763 = vshrl.u32 %v762, 7
          %v764 = vsub.s32 %v761, %v763
          %v765 = vrot.slane %v757, %v764
          %v767 = vunpack.c.l.s4 1934713408
          %v768 = vunpack.c.0.s8 %v767
          %v769 = vlaneseq
          %v770 = vshrl.u32 %v769, 7
          %v771 = vsub.s32 %v768, %v770
          %v772 = vrot.slane %v758, %v771
          %v773 = vcombine.low %v748, %v756
          %v774 = vcombine.high %v748, %v756
          %v776 = vunpack.c.l.s4 1934713408
          %v777 = vunpack.c.0.s8 %v776
          %v778 = vlaneseq
          %v779 = vshrl.u32 %v778, 7
          %v780 = vsub.s32 %v777, %v779
          %v781 = vrot.slane %v773, %v780
          %v783 = vunpack.c.l.s4 1934713408
          %v784 = vunpack.c.0.s8 %v783
          %v785 = vlaneseq
          %v786 = vshrl.u32 %v785, 7
          %v787 = vsub.s32 %v784, %v786
          %v788 = vrot.slane %v774, %v787
          %v789 = vcombine.low %v765, %v781
          %v790 = vcombine.high %v765, %v781
          %v791 = vcombine.low %v772, %v788
          %v792 = vcombine.high %v772, %v788
          %v793 = vpack.c.bf16 %v789, %v789
          %v794 = vpack.c.bf16 %v790, %v790
          %v795 = vpack.c.bf16 %v791, %v791
          %v796 = vpack.c.bf16 %v792, %v792
          %vm797 = vcmask 60416
          %798 = vst.msk [vmem:[#allocation2] sm:$0xf] %vm797, %v793
          %799 = vst.msk [vmem:[#allocation2 + $0x4] sm:$0xf] %vm797, %v794
          %800 = vst.msk [vmem:[#allocation2 + $0x8] sm:$0xf] %vm797, %v795
          %801 = vst.msk [vmem:[#allocation2 + $0xc] sm:$0xf] %vm797, %v796
          %803 = vrot.lane.b32.xlu0 %v642, 120
          %v804 = vpop.permute.xlu0 %803
          %806 = vrot.lane.b32.xlu0 %v642, 112
          %v807 = vpop.permute.xlu0 %806
          %809 = vrot.lane.b32.xlu0 %v642, 104
          %v810 = vpop.permute.xlu0 %809
          %v812 = vcombine.low %v642, %v807
          %v813 = vcombine.high %v642, %v807
          %v815 = vunpack.c.l.s4 1983009808
          %v816 = vunpack.c.0.s8 %v815
          %v817 = vlaneseq
          %v818 = vshrl.u32 %v817, 7
          %v819 = vsub.s32 %v816, %v818
          %v820 = vrot.slane %v812, %v819
          %v822 = vunpack.c.l.s4 1983009808
          %v823 = vunpack.c.0.s8 %v822
          %v824 = vlaneseq
          %v825 = vshrl.u32 %v824, 7
          %v826 = vsub.s32 %v823, %v825
          %v827 = vrot.slane %v813, %v826
          %v828 = vcombine.low %v804, %v810
          %v829 = vcombine.high %v804, %v810
          %v831 = vunpack.c.l.s4 1983009808
          %v832 = vunpack.c.0.s8 %v831
          %v833 = vlaneseq
          %v834 = vshrl.u32 %v833, 7
          %v835 = vsub.s32 %v832, %v834
          %v836 = vrot.slane %v828, %v835
          %v838 = vunpack.c.l.s4 1983009808
          %v839 = vunpack.c.0.s8 %v838
          %v840 = vlaneseq
          %v841 = vshrl.u32 %v840, 7
          %v842 = vsub.s32 %v839, %v841
          %v843 = vrot.slane %v829, %v842
          %v844 = vcombine.low %v820, %v836
          %v845 = vcombine.high %v820, %v836
          %v847 = vunpack.c.l.s4 1934713408
          %v848 = vunpack.c.0.s8 %v847
          %v849 = vlaneseq
          %v850 = vshrl.u32 %v849, 7
          %v851 = vsub.s32 %v848, %v850
          %v852 = vrot.slane %v844, %v851
          %v854 = vunpack.c.l.s4 1934713408
          %v855 = vunpack.c.0.s8 %v854
          %v856 = vlaneseq
          %v857 = vshrl.u32 %v856, 7
          %v858 = vsub.s32 %v855, %v857
          %v859 = vrot.slane %v845, %v858
          %v860 = vcombine.low %v827, %v843
          %v861 = vcombine.high %v827, %v843
          %v863 = vunpack.c.l.s4 1934713408
          %v864 = vunpack.c.0.s8 %v863
          %v865 = vlaneseq
          %v866 = vshrl.u32 %v865, 7
          %v867 = vsub.s32 %v864, %v866
          %v868 = vrot.slane %v860, %v867
          %v870 = vunpack.c.l.s4 1934713408
          %v871 = vunpack.c.0.s8 %v870
          %v872 = vlaneseq
          %v873 = vshrl.u32 %v872, 7
          %v874 = vsub.s32 %v871, %v873
          %v875 = vrot.slane %v861, %v874
          %v876 = vcombine.high %v852, 0.0
          %v877 = vcombine.high %v859, 0.0
          %v878 = vcombine.high %v868, 0.0
          %v879 = vcombine.high %v875, 0.0
          %v880 = vcombine.low %v852, %v859
          %v882 = vunpack.c.l.s4 1983009808
          %v883 = vunpack.c.0.s8 %v882
          %v884 = vlaneseq
          %v885 = vshrl.u32 %v884, 7
          %v886 = vsub.s32 %v883, %v885
          %v887 = vrot.slane %v880, %v886
          %v888 = vcombine.low %v876, %v877
          %v890 = vunpack.c.l.s4 1983009808
          %v891 = vunpack.c.0.s8 %v890
          %v892 = vlaneseq
          %v893 = vshrl.u32 %v892, 7
          %v894 = vsub.s32 %v891, %v893
          %v895 = vrot.slane %v888, %v894
          %v896 = vcombine.low %v868, %v875
          %v898 = vunpack.c.l.s4 1983009808
          %v899 = vunpack.c.0.s8 %v898
          %v900 = vlaneseq
          %v901 = vshrl.u32 %v900, 7
          %v902 = vsub.s32 %v899, %v901
          %v903 = vrot.slane %v896, %v902
          %v904 = vcombine.low %v878, %v879
          %v906 = vunpack.c.l.s4 1983009808
          %v907 = vunpack.c.0.s8 %v906
          %v908 = vlaneseq
          %v909 = vshrl.u32 %v908, 7
          %v910 = vsub.s32 %v907, %v909
          %v911 = vrot.slane %v904, %v910
          %v912 = vcombine.low %v887, %v895
          %v913 = vcombine.high %v887, %v895
          %v915 = vunpack.c.l.s4 1934713408
          %v916 = vunpack.c.0.s8 %v915
          %v917 = vlaneseq
          %v918 = vshrl.u32 %v917, 7
          %v919 = vsub.s32 %v916, %v918
          %v920 = vrot.slane %v912, %v919
          %v922 = vunpack.c.l.s4 1934713408
          %v923 = vunpack.c.0.s8 %v922
          %v924 = vlaneseq
          %v925 = vshrl.u32 %v924, 7
          %v926 = vsub.s32 %v923, %v925
          %v927 = vrot.slane %v913, %v926
          %v928 = vcombine.low %v903, %v911
          %v929 = vcombine.high %v903, %v911
          %v931 = vunpack.c.l.s4 1934713408
          %v932 = vunpack.c.0.s8 %v931
          %v933 = vlaneseq
          %v934 = vshrl.u32 %v933, 7
          %v935 = vsub.s32 %v932, %v934
          %v936 = vrot.slane %v928, %v935
          %v938 = vunpack.c.l.s4 1934713408
          %v939 = vunpack.c.0.s8 %v938
          %v940 = vlaneseq
          %v941 = vshrl.u32 %v940, 7
          %v942 = vsub.s32 %v939, %v941
          %v943 = vrot.slane %v929, %v942
          %v944 = vcombine.low %v920, %v936
          %v945 = vcombine.high %v920, %v936
          %v946 = vcombine.low %v927, %v943
          %v947 = vcombine.high %v927, %v943
          %v948 = vpack.c.bf16 %v944, %v944
          %v949 = vpack.c.bf16 %v945, %v945
          %v950 = vpack.c.bf16 %v946, %v946
          %v951 = vpack.c.bf16 %v947, %v947
          %952 = vst.msk [vmem:[#allocation3] sm:$0xf] %vm797, %v948
          %953 = vst.msk [vmem:[#allocation3 + $0x4] sm:$0xf] %vm797, %v949
          %954 = vst.msk [vmem:[#allocation3 + $0x8] sm:$0xf] %vm797, %v950
          %955 = vst.msk [vmem:[#allocation3 + $0xc] sm:$0xf] %vm797, %v951
        $region96: #{tpu_custom_call.1} parent=55 // pred_fallthru
          _
        %s956 = smul.u32 %s35, 8
        %s957 = scalar_lea.vmem %s409, %s956 [#allocation4]
        %v958 = vld [vmem:[%s957] sm:$0xff]
        %vm959 = vcmask 261120
        %v960 = vsel %vm959, %v958, 0.0
        %961 = vadd.xlane.f32.xlu0 %v960
        %v962 = vpop.xlane.xlu0 %961
        %v963 = vrcp.pop 32.0
        %v964 = vmul.f32 %v962, %v963
        %v965 = vsub.f32 %v958, %v964
        %v966 = vmul.f32 %v965, %v965
        %v967 = vsel %vm959, %v966, 0.0
        %968 = vadd.xlane.f32.xlu0 %v967
        %v969 = vpop.xlane.xlu0 %968
        %v970 = vmul.f32 %v969, 0.032258064
        %v971 = vrsqrt.pop %v970
        %v972 = vmul.f32 %v970, %v971
        %vm973 = vcmp.eq.f32.partialorder %v970, inf
        %v974 = vsel %vm973, %v970, %v972
        %vm975 = vcmp.eq.f32.partialorder %v970, 0.0
        %v976 = vand.u32 %v970, 2147483648
        %v977 = vsel %vm975, %v976, %v974
        %v978 = vadd.f32 %v977, 1e-06
        %v979 = vrcp.pop %v978
        %v980 = vlaneseq
        %v981 = vshrl.u32 %v980, 7
        %v982 = vsub.s32 0, %v981
        %v983 = vrot.slane %v481, %v982
        %v984 = vmul.f32 %v983, %v965
        %v985 = vmul.f32 %v984, %v979
        %v986 = vlaneseq
        %v987 = vshrl.u32 %v986, 7
        %v988 = vsub.s32 0, %v987
        %v989 = vrot.slane %v482, %v988
        %v990 = vadd.f32 %v985, %v989
        %v991 = vpack.c.bf16 %v990, %v990
        %v992 = vld [vmem:[#allocation7] sm:$0xf]
        %v993 = vld [vmem:[#allocation7 + $0x4] sm:$0xf]
        %v994 = vld [vmem:[#allocation7 + $0x8] sm:$0xf]
        %v995 = vld [vmem:[#allocation7 + $0xc] sm:$0xf]
        %v996 = vlaneseq
        %v997 = vshrl.u32 %v996, 7
        %v998 = vsub.s32 0, %v997
        %v999 = vrot.slane %v477, %v998
        %v1004 = vunpack.c.l.b16 %v992
        %v1005 = vunpack.c.l.b16 %v993
        %v1006 = vunpack.c.l.b16 %v994
        %v1007 = vunpack.c.l.b16 %v995
        %v1008 = vpack.c.b16 %v1005, %v1004
        %v1009 = vpack.c.b16 %v1007, %v1006
        %v1013 = vsel %vm959, %v991, 0
        %1015 = vmatprep.subr.bf16.mxu0 0
        %1016 = vmatpush1.bf16.msra.mxu0 %v1008
        %1017 = vmatprep.subr.bf16.mxu0 0
        %1018 = vmatpush1.bf16.msra.mxu0 %v1009
        %1019 = vmatprep.subr.bf16.mxu0 0
        %1020 = vmatpush1.bf16.msra.mxu0 0
        %1021 = vmatprep.subr.bf16.mxu0 0
        %1022 = vmatpush1.bf16.msra.mxu0 0
        %1023 = vmatprep.subr.bf16.mxu0 0
        %1024 = vmatpush1.bf16.msra.mxu0 0
        %1025 = vmatprep.subr.bf16.mxu0 0
        %1026 = vmatpush1.bf16.msra.mxu0 0
        %1027 = vmatprep.subr.bf16.mxu0 0
        %1028 = vmatpush1.bf16.msra.mxu0 0
        %1029 = vmatprep.subr.bf16.mxu0 0
        %1030 = vmatpush1.bf16.msra.mxu0 0
        %1031 = vmatprep.subr.bf16.mxu0 0
        %1032 = vmatpush1.bf16.msra.mxu0 0
        %1033 = vmatprep.subr.bf16.mxu0 0
        %1034 = vmatpush1.bf16.msra.mxu0 0
        %1035 = vmatprep.subr.bf16.mxu0 0
        %1036 = vmatpush1.bf16.msra.mxu0 0
        %1037 = vmatprep.subr.bf16.mxu0 0
        %1038 = vmatpush1.bf16.msra.mxu0 0
        %1039 = vmatprep.subr.bf16.mxu0 0
        %1040 = vmatpush1.bf16.msra.mxu0 0
        %1041 = vmatprep.subr.bf16.mxu0 0
        %1042 = vmatpush1.bf16.msra.mxu0 0
        %1043 = vmatprep.subr.bf16.mxu0 0
        %1044 = vmatpush1.bf16.msra.mxu0 0
        %1045 = vmatprep.subr.bf16.mxu0 0
        %1046 = vmatpush1.bf16.msra.mxu0 0
        %1047 = vmatprep.mubr.bf16.mxu0 0
        %1048 = vmatmul.mubr.bf16.gmra.mrb[0].mxu0 %v1013
        %v1049 = vpop.f32.mrb[0].mxu0
        %v1050 = vadd.f32 %v999, %v1049
        %v1051 = vpop.f32.mrb[0].mxu0
        %v1052 = vpop.f32.mrb[0].mxu0
        %v1053 = vpop.f32.mrb[0].mxu0
        %1054 = vdwg.mxu0
        %1056 = vrot.lane.b32.xlu0 %v1050, 120
        %v1057 = vpop.permute.xlu0 %1056
        %1059 = vrot.lane.b32.xlu0 %v1050, 112
        %v1060 = vpop.permute.xlu0 %1059
        %1062 = vrot.lane.b32.xlu0 %v1050, 104
        %v1063 = vpop.permute.xlu0 %1062
        %v1065 = vcombine.low %v1050, %v1060
        %v1066 = vcombine.high %v1050, %v1060
        %v1068 = vunpack.c.l.s4 1983009808
        %v1069 = vunpack.c.0.s8 %v1068
        %v1070 = vlaneseq
        %v1071 = vshrl.u32 %v1070, 7
        %v1072 = vsub.s32 %v1069, %v1071
        %v1073 = vrot.slane %v1065, %v1072
        %v1075 = vunpack.c.l.s4 1983009808
        %v1076 = vunpack.c.0.s8 %v1075
        %v1077 = vlaneseq
        %v1078 = vshrl.u32 %v1077, 7
        %v1079 = vsub.s32 %v1076, %v1078
        %v1080 = vrot.slane %v1066, %v1079
        %v1081 = vcombine.low %v1057, %v1063
        %v1082 = vcombine.high %v1057, %v1063
        %v1084 = vunpack.c.l.s4 1983009808
        %v1085 = vunpack.c.0.s8 %v1084
        %v1086 = vlaneseq
        %v1087 = vshrl.u32 %v1086, 7
        %v1088 = vsub.s32 %v1085, %v1087
        %v1089 = vrot.slane %v1081, %v1088
        %v1091 = vunpack.c.l.s4 1983009808
        %v1092 = vunpack.c.0.s8 %v1091
        %v1093 = vlaneseq
        %v1094 = vshrl.u32 %v1093, 7
        %v1095 = vsub.s32 %v1092, %v1094
        %v1096 = vrot.slane %v1082, %v1095
        %v1097 = vcombine.low %v1073, %v1089
        %v1098 = vcombine.high %v1073, %v1089
        %v1100 = vunpack.c.l.s4 1934713408
        %v1101 = vunpack.c.0.s8 %v1100
        %v1102 = vlaneseq
        %v1103 = vshrl.u32 %v1102, 7
        %v1104 = vsub.s32 %v1101, %v1103
        %v1105 = vrot.slane %v1097, %v1104
        %v1107 = vunpack.c.l.s4 1934713408
        %v1108 = vunpack.c.0.s8 %v1107
        %v1109 = vlaneseq
        %v1110 = vshrl.u32 %v1109, 7
        %v1111 = vsub.s32 %v1108, %v1110
        %v1112 = vrot.slane %v1098, %v1111
        %v1113 = vcombine.low %v1080, %v1096
        %v1114 = vcombine.high %v1080, %v1096
        %v1116 = vunpack.c.l.s4 1934713408
        %v1117 = vunpack.c.0.s8 %v1116
        %v1118 = vlaneseq
        %v1119 = vshrl.u32 %v1118, 7
        %v1120 = vsub.s32 %v1117, %v1119
        %v1121 = vrot.slane %v1113, %v1120
        %v1123 = vunpack.c.l.s4 1934713408
        %v1124 = vunpack.c.0.s8 %v1123
        %v1125 = vlaneseq
        %v1126 = vshrl.u32 %v1125, 7
        %v1127 = vsub.s32 %v1124, %v1126
        %v1128 = vrot.slane %v1114, %v1127
        %v1129 = vcombine.high %v1105, 0.0
        %v1130 = vcombine.high %v1112, 0.0
        %v1131 = vcombine.high %v1121, 0.0
        %v1132 = vcombine.high %v1128, 0.0
        %v1133 = vcombine.low %v1105, %v1112
        %v1135 = vunpack.c.l.s4 1983009808
        %v1136 = vunpack.c.0.s8 %v1135
        %v1137 = vlaneseq
        %v1138 = vshrl.u32 %v1137, 7
        %v1139 = vsub.s32 %v1136, %v1138
        %v1140 = vrot.slane %v1133, %v1139
        %v1141 = vcombine.low %v1129, %v1130
        %v1143 = vunpack.c.l.s4 1983009808
        %v1144 = vunpack.c.0.s8 %v1143
        %v1145 = vlaneseq
        %v1146 = vshrl.u32 %v1145, 7
        %v1147 = vsub.s32 %v1144, %v1146
        %v1148 = vrot.slane %v1141, %v1147
        %v1149 = vcombine.low %v1121, %v1128
        %v1151 = vunpack.c.l.s4 1983009808
        %v1152 = vunpack.c.0.s8 %v1151
        %v1153 = vlaneseq
        %v1154 = vshrl.u32 %v1153, 7
        %v1155 = vsub.s32 %v1152, %v1154
        %v1156 = vrot.slane %v1149, %v1155
        %v1157 = vcombine.low %v1131, %v1132
        %v1159 = vunpack.c.l.s4 1983009808
        %v1160 = vunpack.c.0.s8 %v1159
        %v1161 = vlaneseq
        %v1162 = vshrl.u32 %v1161, 7
        %v1163 = vsub.s32 %v1160, %v1162
        %v1164 = vrot.slane %v1157, %v1163
        %v1165 = vcombine.low %v1140, %v1148
        %v1166 = vcombine.high %v1140, %v1148
        %v1168 = vunpack.c.l.s4 1934713408
        %v1169 = vunpack.c.0.s8 %v1168
        %v1170 = vlaneseq
        %v1171 = vshrl.u32 %v1170, 7
        %v1172 = vsub.s32 %v1169, %v1171
        %v1173 = vrot.slane %v1165, %v1172
        %v1175 = vunpack.c.l.s4 1934713408
        %v1176 = vunpack.c.0.s8 %v1175
        %v1177 = vlaneseq
        %v1178 = vshrl.u32 %v1177, 7
        %v1179 = vsub.s32 %v1176, %v1178
        %v1180 = vrot.slane %v1166, %v1179
        %v1181 = vcombine.low %v1156, %v1164
        %v1182 = vcombine.high %v1156, %v1164
        %v1184 = vunpack.c.l.s4 1934713408
        %v1185 = vunpack.c.0.s8 %v1184
        %v1186 = vlaneseq
        %v1187 = vshrl.u32 %v1186, 7
        %v1188 = vsub.s32 %v1185, %v1187
        %v1189 = vrot.slane %v1181, %v1188
        %v1191 = vunpack.c.l.s4 1934713408
        %v1192 = vunpack.c.0.s8 %v1191
        %v1193 = vlaneseq
        %v1194 = vshrl.u32 %v1193, 7
        %v1195 = vsub.s32 %v1192, %v1194
        %v1196 = vrot.slane %v1182, %v1195
        %v1197 = vcombine.low %v1173, %v1189
        %v1198 = vcombine.high %v1173, %v1189
        %v1199 = vcombine.low %v1180, %v1196
        %v1200 = vcombine.high %v1180, %v1196
        %v1201 = vpack.c.bf16 %v1197, %v1197
        %v1202 = vpack.c.bf16 %v1198, %v1198
        %v1203 = vpack.c.bf16 %v1199, %v1199
        %v1204 = vpack.c.bf16 %v1200, %v1200
        %v1205 = vld [vmem:[#allocation2] sm:$0xf]
        %v1206 = vld [vmem:[#allocation2 + $0x4] sm:$0xf]
        %v1207 = vld [vmem:[#allocation2 + $0x8] sm:$0xf]
        %v1208 = vld [vmem:[#allocation2 + $0xc] sm:$0xf]
        %v1209 = vld [vmem:[#allocation3] sm:$0xf]
        %v1210 = vld [vmem:[#allocation3 + $0x4] sm:$0xf]
        %v1211 = vld [vmem:[#allocation3 + $0x8] sm:$0xf]
        %v1212 = vld [vmem:[#allocation3 + $0xc] sm:$0xf]
        %vm1213 = vcmask 64512
        %v1215 = vsel %vm1213, %v1201, 0
        %v1218 = vsel %vm1213, %v1205, 0
        %1220 = vmatprep.subr.bf16.mxu0 0
        %1221 = vmatpush1.bf16.xpose.msra.mxu0 %v1218
        %1222 = vmatprep.subr.bf16.mxu0 0
        %1223 = vmatpush1.bf16.xpose.msra.mxu0 0
        %1224 = vmatprep.subr.bf16.mxu0 0
        %1225 = vmatpush1.bf16.xpose.msra.mxu0 0
        %1226 = vmatprep.subr.bf16.mxu0 0
        %1227 = vmatpush1.bf16.xpose.msra.mxu0 0
        %1228 = vmatprep.subr.bf16.mxu0 0
        %1229 = vmatpush1.bf16.xpose.msra.mxu0 0
        %1230 = vmatprep.subr.bf16.mxu0 0
        %1231 = vmatpush1.bf16.xpose.msra.mxu0 0
        %1232 = vmatprep.subr.bf16.mxu0 0
        %1233 = vmatpush1.bf16.xpose.msra.mxu0 0
        %1234 = vmatprep.subr.bf16.mxu0 0
        %1235 = vmatpush1.bf16.xpose.msra.mxu0 0
        %1236 = vmatprep.subr.bf16.mxu0 0
        %1237 = vmatpush1.bf16.xpose.msra.mxu0 0
        %1238 = vmatprep.subr.bf16.mxu0 0
        %1239 = vmatpush1.bf16.xpose.msra.mxu0 0
        %1240 = vmatprep.subr.bf16.mxu0 0
        %1241 = vmatpush1.bf16.xpose.msra.mxu0 0
        %1242 = vmatprep.subr.bf16.mxu0 0
        %1243 = vmatpush1.bf16.xpose.msra.mxu0 0
        %1244 = vmatprep.subr.bf16.mxu0 0
        %1245 = vmatpush1.bf16.xpose.msra.mxu0 0
        %1246 = vmatprep.subr.bf16.mxu0 0
        %1247 = vmatpush1.bf16.xpose.msra.mxu0 0
        %1248 = vmatprep.subr.bf16.mxu0 0
        %1249 = vmatpush1.bf16.xpose.msra.mxu0 0
        %1250 = vmatprep.subr.bf16.mxu0 0
        %1251 = vmatpush1.bf16.xpose.msra.mxu0 0
        %1252 = vmatprep.mubr.bf16.mxu0 0
        %1253 = vmatmul.mubr.bf16.gmra.mrb[0].mxu0 %v1215
        %v1254 = vpop.f32.mrb[0].mxu0
        %v1255 = vadd.f32 0.0, %v1254
        %v1256 = vpop.f32.mrb[0].mxu0
        %v1257 = vpop.f32.mrb[0].mxu0
        %v1258 = vpop.f32.mrb[0].mxu0
        %1259 = vdwg.mxu0
        %v1261 = vsel %vm1213, %v1202, 0
        %v1264 = vsel %vm1213, %v1206, 0
        %1266 = vmatprep.subr.bf16.mxu0 0
        %1267 = vmatpush1.bf16.xpose.msra.mxu0 %v1264
        %1268 = vmatprep.subr.bf16.mxu0 0
        %1269 = vmatpush1.bf16.xpose.msra.mxu0 0
        %1270 = vmatprep.subr.bf16.mxu0 0
        %1271 = vmatpush1.bf16.xpose.msra.mxu0 0
        %1272 = vmatprep.subr.bf16.mxu0 0
        %1273 = vmatpush1.bf16.xpose.msra.mxu0 0
        %1274 = vmatprep.subr.bf16.mxu0 0
        %1275 = vmatpush1.bf16.xpose.msra.mxu0 0
        %1276 = vmatprep.subr.bf16.mxu0 0
        %1277 = vmatpush1.bf16.xpose.msra.mxu0 0
        %1278 = vmatprep.subr.bf16.mxu0 0
        %1279 = vmatpush1.bf16.xpose.msra.mxu0 0
        %1280 = vmatprep.subr.bf16.mxu0 0
        %1281 = vmatpush1.bf16.xpose.msra.mxu0 0
        %1282 = vmatprep.subr.bf16.mxu0 0
        %1283 = vmatpush1.bf16.xpose.msra.mxu0 0
        %1284 = vmatprep.subr.bf16.mxu0 0
        %1285 = vmatpush1.bf16.xpose.msra.mxu0 0
        %1286 = vmatprep.subr.bf16.mxu0 0
        %1287 = vmatpush1.bf16.xpose.msra.mxu0 0
        %1288 = vmatprep.subr.bf16.mxu0 0
        %1289 = vmatpush1.bf16.xpose.msra.mxu0 0
        %1290 = vmatprep.subr.bf16.mxu0 0
        %1291 = vmatpush1.bf16.xpose.msra.mxu0 0
        %1292 = vmatprep.subr.bf16.mxu0 0
        %1293 = vmatpush1.bf16.xpose.msra.mxu0 0
        %1294 = vmatprep.subr.bf16.mxu0 0
        %1295 = vmatpush1.bf16.xpose.msra.mxu0 0
        %1296 = vmatprep.subr.bf16.mxu0 0
        %1297 = vmatpush1.bf16.xpose.msra.mxu0 0
        %1298 = vmatprep.mubr.bf16.mxu0 0
        %1299 = vmatmul.mubr.bf16.gmra.mrb[0].mxu0 %v1261
        %v1300 = vpop.f32.mrb[0].mxu0
        %v1301 = vadd.f32 0.0, %v1300
        %v1302 = vpop.f32.mrb[0].mxu0
        %v1303 = vpop.f32.mrb[0].mxu0
        %v1304 = vpop.f32.mrb[0].mxu0
        %1305 = vdwg.mxu0
        %v1307 = vsel %vm1213, %v1203, 0
        %v1310 = vsel %vm1213, %v1207, 0
        %1312 = vmatprep.subr.bf16.mxu0 0
        %1313 = vmatpush1.bf16.xpose.msra.mxu0 %v1310
        %1314 = vmatprep.subr.bf16.mxu0 0
        %1315 = vmatpush1.bf16.xpose.msra.mxu0 0
        %1316 = vmatprep.subr.bf16.mxu0 0
        %1317 = vmatpush1.bf16.xpose.msra.mxu0 0
        %1318 = vmatprep.subr.bf16.mxu0 0
        %1319 = vmatpush1.bf16.xpose.msra.mxu0 0
        %1320 = vmatprep.subr.bf16.mxu0 0
        %1321 = vmatpush1.bf16.xpose.msra.mxu0 0
        %1322 = vmatprep.subr.bf16.mxu0 0
        %1323 = vmatpush1.bf16.xpose.msra.mxu0 0
        %1324 = vmatprep.subr.bf16.mxu0 0
        %1325 = vmatpush1.bf16.xpose.msra.mxu0 0
        %1326 = vmatprep.subr.bf16.mxu0 0
        %1327 = vmatpush1.bf16.xpose.msra.mxu0 0
        %1328 = vmatprep.subr.bf16.mxu0 0
        %1329 = vmatpush1.bf16.xpose.msra.mxu0 0
        %1330 = vmatprep.subr.bf16.mxu0 0
        %1331 = vmatpush1.bf16.xpose.msra.mxu0 0
        %1332 = vmatprep.subr.bf16.mxu0 0
        %1333 = vmatpush1.bf16.xpose.msra.mxu0 0
        %1334 = vmatprep.subr.bf16.mxu0 0
        %1335 = vmatpush1.bf16.xpose.msra.mxu0 0
        %1336 = vmatprep.subr.bf16.mxu0 0
        %1337 = vmatpush1.bf16.xpose.msra.mxu0 0
        %1338 = vmatprep.subr.bf16.mxu0 0
        %1339 = vmatpush1.bf16.xpose.msra.mxu0 0
        %1340 = vmatprep.subr.bf16.mxu0 0
        %1341 = vmatpush1.bf16.xpose.msra.mxu0 0
        %1342 = vmatprep.subr.bf16.mxu0 0
        %1343 = vmatpush1.bf16.xpose.msra.mxu0 0
        %1344 = vmatprep.mubr.bf16.mxu0 0
        %1345 = vmatmul.mubr.bf16.gmra.mrb[0].mxu0 %v1307
        %v1346 = vpop.f32.mrb[0].mxu0
        %v1347 = vadd.f32 0.0, %v1346
        %v1348 = vpop.f32.mrb[0].mxu0
        %v1349 = vpop.f32.mrb[0].mxu0
        %v1350 = vpop.f32.mrb[0].mxu0
        %1351 = vdwg.mxu0
        %v1353 = vsel %vm1213, %v1204, 0
        %v1356 = vsel %vm1213, %v1208, 0
        %1358 = vmatprep.subr.bf16.mxu0 0
        %1359 = vmatpush1.bf16.xpose.msra.mxu0 %v1356
        %1360 = vmatprep.subr.bf16.mxu0 0
        %1361 = vmatpush1.bf16.xpose.msra.mxu0 0
        %1362 = vmatprep.subr.bf16.mxu0 0
        %1363 = vmatpush1.bf16.xpose.msra.mxu0 0
        %1364 = vmatprep.subr.bf16.mxu0 0
        %1365 = vmatpush1.bf16.xpose.msra.mxu0 0
        %1366 = vmatprep.subr.bf16.mxu0 0
        %1367 = vmatpush1.bf16.xpose.msra.mxu0 0
        %1368 = vmatprep.subr.bf16.mxu0 0
        %1369 = vmatpush1.bf16.xpose.msra.mxu0 0
        %1370 = vmatprep.subr.bf16.mxu0 0
        %1371 = vmatpush1.bf16.xpose.msra.mxu0 0
        %1372 = vmatprep.subr.bf16.mxu0 0
        %1373 = vmatpush1.bf16.xpose.msra.mxu0 0
        %1374 = vmatprep.subr.bf16.mxu0 0
        %1375 = vmatpush1.bf16.xpose.msra.mxu0 0
        %1376 = vmatprep.subr.bf16.mxu0 0
        %1377 = vmatpush1.bf16.xpose.msra.mxu0 0
        %1378 = vmatprep.subr.bf16.mxu0 0
        %1379 = vmatpush1.bf16.xpose.msra.mxu0 0
        %1380 = vmatprep.subr.bf16.mxu0 0
        %1381 = vmatpush1.bf16.xpose.msra.mxu0 0
        %1382 = vmatprep.subr.bf16.mxu0 0
        %1383 = vmatpush1.bf16.xpose.msra.mxu0 0
        %1384 = vmatprep.subr.bf16.mxu0 0
        %1385 = vmatpush1.bf16.xpose.msra.mxu0 0
        %1386 = vmatprep.subr.bf16.mxu0 0
        %1387 = vmatpush1.bf16.xpose.msra.mxu0 0
        %1388 = vmatprep.subr.bf16.mxu0 0
        %1389 = vmatpush1.bf16.xpose.msra.mxu0 0
        %1390 = vmatprep.mubr.bf16.mxu0 0
        %1391 = vmatmul.mubr.bf16.gmra.mrb[0].mxu0 %v1353
        %v1392 = vpop.f32.mrb[0].mxu0
        %v1393 = vadd.f32 0.0, %v1392
        %v1394 = vpop.f32.mrb[0].mxu0
        %v1395 = vpop.f32.mrb[0].mxu0
        %v1396 = vpop.f32.mrb[0].mxu0
        %1397 = vdwg.mxu0
        %v1398 = vmul.f32 %v1255, 0.35355338
        %v1399 = vmul.f32 %v1301, 0.35355338
        %v1400 = vmul.f32 %v1347, 0.35355338
        %v1401 = vmul.f32 %v1393, 0.35355338
        %v1402 = vsel %vm1213, %v1398, -inf
        %1403 = vmax.xlane.f32.xlu0 %v1402
        %v1404 = vpop.xlane.xlu0 %1403
        %v1405 = vsel %vm1213, %v1399, -inf
        %1406 = vmax.xlane.f32.xlu0 %v1405
        %v1407 = vpop.xlane.xlu0 %1406
        %v1408 = vsel %vm1213, %v1400, -inf
        %1409 = vmax.xlane.f32.xlu0 %v1408
        %v1410 = vpop.xlane.xlu0 %1409
        %v1411 = vsel %vm1213, %v1401, -inf
        %1412 = vmax.xlane.f32.xlu0 %v1411
        %v1413 = vpop.xlane.xlu0 %1412
        %v1414 = vsub.f32 %v1398, %v1404
        %v1415 = vsub.f32 %v1399, %v1407
        %v1416 = vsub.f32 %v1400, %v1410
        %v1417 = vsub.f32 %v1401, %v1413
        %v1418 = vmul.f32 %v1414, 1.442695
        %v1419 = vpow.pop %v1418
        %v1420 = vmul.f32 %v1415, 1.442695
        %v1421 = vpow.pop %v1420
        %v1422 = vmul.f32 %v1416, 1.442695
        %v1423 = vpow.pop %v1422
        %v1424 = vmul.f32 %v1417, 1.442695
        %v1425 = vpow.pop %v1424
        %v1426 = vsel %vm1213, %v1419, 0.0
        %1427 = vadd.xlane.f32.xlu0 %v1426
        %v1428 = vpop.xlane.xlu0 %1427
        %v1429 = vsel %vm1213, %v1421, 0.0
        %1430 = vadd.xlane.f32.xlu0 %v1429
        %v1431 = vpop.xlane.xlu0 %1430
        %v1432 = vsel %vm1213, %v1423, 0.0
        %1433 = vadd.xlane.f32.xlu0 %v1432
        %v1434 = vpop.xlane.xlu0 %1433
        %v1435 = vsel %vm1213, %v1425, 0.0
        %1436 = vadd.xlane.f32.xlu0 %v1435
        %v1437 = vpop.xlane.xlu0 %1436
        %v1438 = vrcp.pop %v1428
        %v1439 = vrcp.pop %v1431
        %v1440 = vrcp.pop %v1434
        %v1441 = vrcp.pop %v1437
        %v1442 = vmul.f32 %v1419, %v1438
        %v1443 = vmul.f32 %v1421, %v1439
        %v1444 = vmul.f32 %v1423, %v1440
        %v1445 = vmul.f32 %v1425, %v1441
        %v1446 = vpack.c.bf16 %v1442, %v1442
        %v1447 = vpack.c.bf16 %v1443, %v1443
        %v1448 = vpack.c.bf16 %v1444, %v1444
        %v1449 = vpack.c.bf16 %v1445, %v1445
        %v1451 = vsel %vm1213, %v1446, 0
        %vm1453 = vcmask 1043456
        %v1455 = vsel %vm1453, %v1209, 0
        %1457 = vmatprep.subr.bf16.mxu0 0
        %1458 = vmatpush1.bf16.msra.mxu0 %v1455
        %1459 = vmatprep.subr.bf16.mxu0 0
        %1460 = vmatpush1.bf16.msra.mxu0 0
        %1461 = vmatprep.subr.bf16.mxu0 0
        %1462 = vmatpush1.bf16.msra.mxu0 0
        %1463 = vmatprep.subr.bf16.mxu0 0
        %1464 = vmatpush1.bf16.msra.mxu0 0
        %1465 = vmatprep.subr.bf16.mxu0 0
        %1466 = vmatpush1.bf16.msra.mxu0 0
        %1467 = vmatprep.subr.bf16.mxu0 0
        %1468 = vmatpush1.bf16.msra.mxu0 0
        %1469 = vmatprep.subr.bf16.mxu0 0
        %1470 = vmatpush1.bf16.msra.mxu0 0
        %1471 = vmatprep.subr.bf16.mxu0 0
        %1472 = vmatpush1.bf16.msra.mxu0 0
        %1473 = vmatprep.subr.bf16.mxu0 0
        %1474 = vmatpush1.bf16.msra.mxu0 0
        %1475 = vmatprep.subr.bf16.mxu0 0
        %1476 = vmatpush1.bf16.msra.mxu0 0
        %1477 = vmatprep.subr.bf16.mxu0 0
        %1478 = vmatpush1.bf16.msra.mxu0 0
        %1479 = vmatprep.subr.bf16.mxu0 0
        %1480 = vmatpush1.bf16.msra.mxu0 0
        %1481 = vmatprep.subr.bf16.mxu0 0
        %1482 = vmatpush1.bf16.msra.mxu0 0
        %1483 = vmatprep.subr.bf16.mxu0 0
        %1484 = vmatpush1.bf16.msra.mxu0 0
        %1485 = vmatprep.subr.bf16.mxu0 0
        %1486 = vmatpush1.bf16.msra.mxu0 0
        %1487 = vmatprep.subr.bf16.mxu0 0
        %1488 = vmatpush1.bf16.msra.mxu0 0
        %1489 = vmatprep.mubr.bf16.mxu0 0
        %1490 = vmatmul.mubr.bf16.gmra.mrb[0].mxu0 %v1451
        %v1491 = vpop.f32.mrb[0].mxu0
        %v1492 = vadd.f32 0.0, %v1491
        %v1493 = vpop.f32.mrb[0].mxu0
        %v1494 = vpop.f32.mrb[0].mxu0
        %v1495 = vpop.f32.mrb[0].mxu0
        %1496 = vdwg.mxu0
        %v1498 = vsel %vm1213, %v1447, 0
        %v1501 = vsel %vm1453, %v1210, 0
        %1503 = vmatprep.subr.bf16.mxu0 0
        %1504 = vmatpush1.bf16.msra.mxu0 %v1501
        %1505 = vmatprep.subr.bf16.mxu0 0
        %1506 = vmatpush1.bf16.msra.mxu0 0
        %1507 = vmatprep.subr.bf16.mxu0 0
        %1508 = vmatpush1.bf16.msra.mxu0 0
        %1509 = vmatprep.subr.bf16.mxu0 0
        %1510 = vmatpush1.bf16.msra.mxu0 0
        %1511 = vmatprep.subr.bf16.mxu0 0
        %1512 = vmatpush1.bf16.msra.mxu0 0
        %1513 = vmatprep.subr.bf16.mxu0 0
        %1514 = vmatpush1.bf16.msra.mxu0 0
        %1515 = vmatprep.subr.bf16.mxu0 0
        %1516 = vmatpush1.bf16.msra.mxu0 0
        %1517 = vmatprep.subr.bf16.mxu0 0
        %1518 = vmatpush1.bf16.msra.mxu0 0
        %1519 = vmatprep.subr.bf16.mxu0 0
        %1520 = vmatpush1.bf16.msra.mxu0 0
        %1521 = vmatprep.subr.bf16.mxu0 0
        %1522 = vmatpush1.bf16.msra.mxu0 0
        %1523 = vmatprep.subr.bf16.mxu0 0
        %1524 = vmatpush1.bf16.msra.mxu0 0
        %1525 = vmatprep.subr.bf16.mxu0 0
        %1526 = vmatpush1.bf16.msra.mxu0 0
        %1527 = vmatprep.subr.bf16.mxu0 0
        %1528 = vmatpush1.bf16.msra.mxu0 0
        %1529 = vmatprep.subr.bf16.mxu0 0
        %1530 = vmatpush1.bf16.msra.mxu0 0
        %1531 = vmatprep.subr.bf16.mxu0 0
        %1532 = vmatpush1.bf16.msra.mxu0 0
        %1533 = vmatprep.subr.bf16.mxu0 0
        %1534 = vmatpush1.bf16.msra.mxu0 0
        %1535 = vmatprep.mubr.bf16.mxu0 0
        %1536 = vmatmul.mubr.bf16.gmra.mrb[0].mxu0 %v1498
        %v1537 = vpop.f32.mrb[0].mxu0
        %v1538 = vadd.f32 0.0, %v1537
        %v1539 = vpop.f32.mrb[0].mxu0
        %v1540 = vpop.f32.mrb[0].mxu0
        %v1541 = vpop.f32.mrb[0].mxu0
        %1542 = vdwg.mxu0
        %v1544 = vsel %vm1213, %v1448, 0
        %v1547 = vsel %vm1453, %v1211, 0
        %1549 = vmatprep.subr.bf16.mxu0 0
        %1550 = vmatpush1.bf16.msra.mxu0 %v1547
        %1551 = vmatprep.subr.bf16.mxu0 0
        %1552 = vmatpush1.bf16.msra.mxu0 0
        %1553 = vmatprep.subr.bf16.mxu0 0
        %1554 = vmatpush1.bf16.msra.mxu0 0
        %1555 = vmatprep.subr.bf16.mxu0 0
        %1556 = vmatpush1.bf16.msra.mxu0 0
        %1557 = vmatprep.subr.bf16.mxu0 0
        %1558 = vmatpush1.bf16.msra.mxu0 0
        %1559 = vmatprep.subr.bf16.mxu0 0
        %1560 = vmatpush1.bf16.msra.mxu0 0
        %1561 = vmatprep.subr.bf16.mxu0 0
        %1562 = vmatpush1.bf16.msra.mxu0 0
        %1563 = vmatprep.subr.bf16.mxu0 0
        %1564 = vmatpush1.bf16.msra.mxu0 0
        %1565 = vmatprep.subr.bf16.mxu0 0
        %1566 = vmatpush1.bf16.msra.mxu0 0
        %1567 = vmatprep.subr.bf16.mxu0 0
        %1568 = vmatpush1.bf16.msra.mxu0 0
        %1569 = vmatprep.subr.bf16.mxu0 0
        %1570 = vmatpush1.bf16.msra.mxu0 0
        %1571 = vmatprep.subr.bf16.mxu0 0
        %1572 = vmatpush1.bf16.msra.mxu0 0
        %1573 = vmatprep.subr.bf16.mxu0 0
        %1574 = vmatpush1.bf16.msra.mxu0 0
        %1575 = vmatprep.subr.bf16.mxu0 0
        %1576 = vmatpush1.bf16.msra.mxu0 0
        %1577 = vmatprep.subr.bf16.mxu0 0
        %1578 = vmatpush1.bf16.msra.mxu0 0
        %1579 = vmatprep.subr.bf16.mxu0 0
        %1580 = vmatpush1.bf16.msra.mxu0 0
        %1581 = vmatprep.mubr.bf16.mxu0 0
        %1582 = vmatmul.mubr.bf16.gmra.mrb[0].mxu0 %v1544
        %v1583 = vpop.f32.mrb[0].mxu0
        %v1584 = vadd.f32 0.0, %v1583
        %v1585 = vpop.f32.mrb[0].mxu0
        %v1586 = vpop.f32.mrb[0].mxu0
        %v1587 = vpop.f32.mrb[0].mxu0
        %1588 = vdwg.mxu0
        %v1590 = vsel %vm1213, %v1449, 0
        %v1593 = vsel %vm1453, %v1212, 0
        %1595 = vmatprep.subr.bf16.mxu0 0
        %1596 = vmatpush1.bf16.msra.mxu0 %v1593
        %1597 = vmatprep.subr.bf16.mxu0 0
        %1598 = vmatpush1.bf16.msra.mxu0 0
        %1599 = vmatprep.subr.bf16.mxu0 0
        %1600 = vmatpush1.bf16.msra.mxu0 0
        %1601 = vmatprep.subr.bf16.mxu0 0
        %1602 = vmatpush1.bf16.msra.mxu0 0
        %1603 = vmatprep.subr.bf16.mxu0 0
        %1604 = vmatpush1.bf16.msra.mxu0 0
        %1605 = vmatprep.subr.bf16.mxu0 0
        %1606 = vmatpush1.bf16.msra.mxu0 0
        %1607 = vmatprep.subr.bf16.mxu0 0
        %1608 = vmatpush1.bf16.msra.mxu0 0
        %1609 = vmatprep.subr.bf16.mxu0 0
        %1610 = vmatpush1.bf16.msra.mxu0 0
        %1611 = vmatprep.subr.bf16.mxu0 0
        %1612 = vmatpush1.bf16.msra.mxu0 0
        %1613 = vmatprep.subr.bf16.mxu0 0
        %1614 = vmatpush1.bf16.msra.mxu0 0
        %1615 = vmatprep.subr.bf16.mxu0 0
        %1616 = vmatpush1.bf16.msra.mxu0 0
        %1617 = vmatprep.subr.bf16.mxu0 0
        %1618 = vmatpush1.bf16.msra.mxu0 0
        %1619 = vmatprep.subr.bf16.mxu0 0
        %1620 = vmatpush1.bf16.msra.mxu0 0
        %1621 = vmatprep.subr.bf16.mxu0 0
        %1622 = vmatpush1.bf16.msra.mxu0 0
        %1623 = vmatprep.subr.bf16.mxu0 0
        %1624 = vmatpush1.bf16.msra.mxu0 0
        %1625 = vmatprep.subr.bf16.mxu0 0
        %1626 = vmatpush1.bf16.msra.mxu0 0
        %1627 = vmatprep.mubr.bf16.mxu0 0
        %1628 = vmatmul.mubr.bf16.gmra.mrb[0].mxu0 %v1590
        %v1629 = vpop.f32.mrb[0].mxu0
        %v1630 = vadd.f32 0.0, %v1629
        %v1631 = vpop.f32.mrb[0].mxu0
        %v1632 = vpop.f32.mrb[0].mxu0
        %v1633 = vpop.f32.mrb[0].mxu0
        %1634 = vdwg.mxu0
        %v1635 = vcombine.low %v1492, %v1584
        %v1636 = vcombine.high %v1492, %v1584
        %v1638 = vunpack.c.l.s4 1983009808
        %v1639 = vunpack.c.0.s8 %v1638
        %v1640 = vlaneseq
        %v1641 = vshrl.u32 %v1640, 7
        %v1642 = vsub.s32 %v1639, %v1641
        %v1643 = vrot.slane %v1635, %v1642
        %v1645 = vunpack.c.l.s4 1983009808
        %v1646 = vunpack.c.0.s8 %v1645
        %v1647 = vlaneseq
        %v1648 = vshrl.u32 %v1647, 7
        %v1649 = vsub.s32 %v1646, %v1648
        %v1650 = vrot.slane %v1636, %v1649
        %v1651 = vcombine.low %v1538, %v1630
        %v1652 = vcombine.high %v1538, %v1630
        %v1654 = vunpack.c.l.s4 1983009808
        %v1655 = vunpack.c.0.s8 %v1654
        %v1656 = vlaneseq
        %v1657 = vshrl.u32 %v1656, 7
        %v1658 = vsub.s32 %v1655, %v1657
        %v1659 = vrot.slane %v1651, %v1658
        %v1661 = vunpack.c.l.s4 1983009808
        %v1662 = vunpack.c.0.s8 %v1661
        %v1663 = vlaneseq
        %v1664 = vshrl.u32 %v1663, 7
        %v1665 = vsub.s32 %v1662, %v1664
        %v1666 = vrot.slane %v1652, %v1665
        %v1667 = vcombine.low %v1643, %v1659
        %v1668 = vcombine.high %v1643, %v1659
        %v1670 = vunpack.c.l.s4 1934713408
        %v1671 = vunpack.c.0.s8 %v1670
        %v1672 = vlaneseq
        %v1673 = vshrl.u32 %v1672, 7
        %v1674 = vsub.s32 %v1671, %v1673
        %v1675 = vrot.slane %v1667, %v1674
        %v1677 = vunpack.c.l.s4 1934713408
        %v1678 = vunpack.c.0.s8 %v1677
        %v1679 = vlaneseq
        %v1680 = vshrl.u32 %v1679, 7
        %v1681 = vsub.s32 %v1678, %v1680
        %v1682 = vrot.slane %v1668, %v1681
        %v1683 = vcombine.low %v1650, %v1666
        %v1684 = vcombine.high %v1650, %v1666
        %v1686 = vunpack.c.l.s4 1934713408
        %v1687 = vunpack.c.0.s8 %v1686
        %v1688 = vlaneseq
        %v1689 = vshrl.u32 %v1688, 7
        %v1690 = vsub.s32 %v1687, %v1689
        %v1691 = vrot.slane %v1683, %v1690
        %v1693 = vunpack.c.l.s4 1934713408
        %v1694 = vunpack.c.0.s8 %v1693
        %v1695 = vlaneseq
        %v1696 = vshrl.u32 %v1695, 7
        %v1697 = vsub.s32 %v1694, %v1696
        %v1698 = vrot.slane %v1684, %v1697
        %v1699 = vcombine.high %v1675, 0.0
        %v1700 = vcombine.high %v1682, 0.0
        %v1701 = vcombine.high %v1691, 0.0
        %v1702 = vcombine.high %v1698, 0.0
        %v1703 = vcombine.low %v1675, %v1682
        %v1705 = vunpack.c.l.s4 1983009808
        %v1706 = vunpack.c.0.s8 %v1705
        %v1707 = vlaneseq
        %v1708 = vshrl.u32 %v1707, 7
        %v1709 = vsub.s32 %v1706, %v1708
        %v1710 = vrot.slane %v1703, %v1709
        %v1711 = vcombine.low %v1699, %v1700
        %v1713 = vunpack.c.l.s4 1983009808
        %v1714 = vunpack.c.0.s8 %v1713
        %v1715 = vlaneseq
        %v1716 = vshrl.u32 %v1715, 7
        %v1717 = vsub.s32 %v1714, %v1716
        %v1718 = vrot.slane %v1711, %v1717
        %v1719 = vcombine.low %v1691, %v1698
        %v1721 = vunpack.c.l.s4 1983009808
        %v1722 = vunpack.c.0.s8 %v1721
        %v1723 = vlaneseq
        %v1724 = vshrl.u32 %v1723, 7
        %v1725 = vsub.s32 %v1722, %v1724
        %v1726 = vrot.slane %v1719, %v1725
        %v1727 = vcombine.low %v1701, %v1702
        %v1729 = vunpack.c.l.s4 1983009808
        %v1730 = vunpack.c.0.s8 %v1729
        %v1731 = vlaneseq
        %v1732 = vshrl.u32 %v1731, 7
        %v1733 = vsub.s32 %v1730, %v1732
        %v1734 = vrot.slane %v1727, %v1733
        %v1735 = vcombine.low %v1710, %v1718
        %v1736 = vcombine.high %v1710, %v1718
        %v1738 = vunpack.c.l.s4 1934713408
        %v1739 = vunpack.c.0.s8 %v1738
        %v1740 = vlaneseq
        %v1741 = vshrl.u32 %v1740, 7
        %v1742 = vsub.s32 %v1739, %v1741
        %v1743 = vrot.slane %v1735, %v1742
        %v1745 = vunpack.c.l.s4 1934713408
        %v1746 = vunpack.c.0.s8 %v1745
        %v1747 = vlaneseq
        %v1748 = vshrl.u32 %v1747, 7
        %v1749 = vsub.s32 %v1746, %v1748
        %v1750 = vrot.slane %v1736, %v1749
        %v1751 = vcombine.low %v1726, %v1734
        %v1752 = vcombine.high %v1726, %v1734
        %v1754 = vunpack.c.l.s4 1934713408
        %v1755 = vunpack.c.0.s8 %v1754
        %v1756 = vlaneseq
        %v1757 = vshrl.u32 %v1756, 7
        %v1758 = vsub.s32 %v1755, %v1757
        %v1759 = vrot.slane %v1751, %v1758
        %v1761 = vunpack.c.l.s4 1934713408
        %v1762 = vunpack.c.0.s8 %v1761
        %v1763 = vlaneseq
        %v1764 = vshrl.u32 %v1763, 7
        %v1765 = vsub.s32 %v1762, %v1764
        %v1766 = vrot.slane %v1752, %v1765
        %v1767 = vcombine.low %v1743, %v1759
        %v1768 = vcombine.high %v1743, %v1759
        %v1769 = vcombine.low %v1750, %v1766
        %v1770 = vcombine.high %v1750, %v1766
        %1772 = vrot.lane.b32.xlu0 %v1768, 8
        %v1773 = vpop.permute.xlu0 %1772
        %1776 = vrot.lane.b32.xlu0 %v1769, 16
        %v1777 = vpop.permute.xlu0 %1776
        %1780 = vrot.lane.b32.xlu0 %v1770, 24
        %v1781 = vpop.permute.xlu0 %1780
        %v1783 = vsel %vm1213, %v1767, %v1773
        %vm1784 = vcmask 130048
        %v1785 = vsel %vm1784, %v1783, %v1777
        %vm1786 = vcmask 195584
        %v1787 = vsel %vm1786, %v1785, %v1781
        %v1788 = vpack.c.bf16 %v1787, %v1787
        %v1789 = vld [vmem:[#allocation12] sm:$0xf]
        %v1790 = vld [vmem:[#allocation12 + $0x4] sm:$0xf]
        %v1791 = vld [vmem:[#allocation12 + $0x8] sm:$0xf]
        %v1792 = vld [vmem:[#allocation12 + $0xc] sm:$0xf]
        %v1793 = vlaneseq
        %v1794 = vshrl.u32 %v1793, 7
        %v1795 = vsub.s32 0, %v1794
        %v1796 = vrot.slane %v480, %v1795
        %v1801 = vunpack.c.l.b16 %v1789
        %v1802 = vunpack.c.l.b16 %v1790
        %v1803 = vunpack.c.l.b16 %v1791
        %v1804 = vunpack.c.l.b16 %v1792
        %v1805 = vpack.c.b16 %v1802, %v1801
        %v1806 = vpack.c.b16 %v1804, %v1803
        %v1810 = vsel %vm959, %v1788, 0
        %1812 = vmatprep.subr.bf16.mxu0 0
        %1813 = vmatpush1.bf16.msra.mxu0 %v1805
        %1814 = vmatprep.subr.bf16.mxu0 0
        %1815 = vmatpush1.bf16.msra.mxu0 %v1806
        %1816 = vmatprep.subr.bf16.mxu0 0
        %1817 = vmatpush1.bf16.msra.mxu0 0
        %1818 = vmatprep.subr.bf16.mxu0 0
        %1819 = vmatpush1.bf16.msra.mxu0 0
        %1820 = vmatprep.subr.bf16.mxu0 0
        %1821 = vmatpush1.bf16.msra.mxu0 0
        %1822 = vmatprep.subr.bf16.mxu0 0
        %1823 = vmatpush1.bf16.msra.mxu0 0
        %1824 = vmatprep.subr.bf16.mxu0 0
        %1825 = vmatpush1.bf16.msra.mxu0 0
        %1826 = vmatprep.subr.bf16.mxu0 0
        %1827 = vmatpush1.bf16.msra.mxu0 0
        %1828 = vmatprep.subr.bf16.mxu0 0
        %1829 = vmatpush1.bf16.msra.mxu0 0
        %1830 = vmatprep.subr.bf16.mxu0 0
        %1831 = vmatpush1.bf16.msra.mxu0 0
        %1832 = vmatprep.subr.bf16.mxu0 0
        %1833 = vmatpush1.bf16.msra.mxu0 0
        %1834 = vmatprep.subr.bf16.mxu0 0
        %1835 = vmatpush1.bf16.msra.mxu0 0
        %1836 = vmatprep.subr.bf16.mxu0 0
        %1837 = vmatpush1.bf16.msra.mxu0 0
        %1838 = vmatprep.subr.bf16.mxu0 0
        %1839 = vmatpush1.bf16.msra.mxu0 0
        %1840 = vmatprep.subr.bf16.mxu0 0
        %1841 = vmatpush1.bf16.msra.mxu0 0
        %1842 = vmatprep.subr.bf16.mxu0 0
        %1843 = vmatpush1.bf16.msra.mxu0 0
        %1844 = vmatprep.mubr.bf16.mxu0 0
        %1845 = vmatmul.mubr.bf16.gmra.mrb[0].mxu0 %v1810
        %v1846 = vpop.f32.mrb[0].mxu0
        %v1847 = vadd.f32 %v1796, %v1846
        %v1848 = vpop.f32.mrb[0].mxu0
        %v1849 = vpop.f32.mrb[0].mxu0
        %v1850 = vpop.f32.mrb[0].mxu0
        %1851 = vdwg.mxu0
        %v1852 = vadd.f32 %v958, %v1847
        %v1853 = vsel %vm959, %v1852, 0.0
        %1854 = vadd.xlane.f32.xlu0 %v1853
        %v1855 = vpop.xlane.xlu0 %1854
        %v1856 = vmul.f32 %v1855, %v963
        %v1857 = vsub.f32 %v1852, %v1856
        %v1858 = vmul.f32 %v1857, %v1857
        %v1859 = vsel %vm959, %v1858, 0.0
        %1860 = vadd.xlane.f32.xlu0 %v1859
        %v1861 = vpop.xlane.xlu0 %1860
        %v1862 = vmul.f32 %v1861, 0.032258064
        %v1863 = vrsqrt.pop %v1862
        %v1864 = vmul.f32 %v1862, %v1863
        %vm1865 = vcmp.eq.f32.partialorder %v1862, inf
        %v1866 = vsel %vm1865, %v1862, %v1864
        %vm1867 = vcmp.eq.f32.partialorder %v1862, 0.0
        %v1868 = vand.u32 %v1862, 2147483648
        %v1869 = vsel %vm1867, %v1868, %v1866
        %v1870 = vadd.f32 %v1869, 1e-06
        %v1871 = vrcp.pop %v1870
        %v1872 = vlaneseq
        %v1873 = vshrl.u32 %v1872, 7
        %v1874 = vsub.s32 0, %v1873
        %v1875 = vrot.slane %v483, %v1874
        %v1876 = vmul.f32 %v1875, %v1857
        %v1877 = vmul.f32 %v1876, %v1871
        %v1878 = vlaneseq
        %v1879 = vshrl.u32 %v1878, 7
        %v1880 = vsub.s32 0, %v1879
        %v1881 = vrot.slane %v484, %v1880
        %v1882 = vadd.f32 %v1877, %v1881
        %v1883 = vpack.c.bf16 %v1882, %v1882
        %v1884 = vld [vmem:[#allocation13] sm:$0xf]
        %v1885 = vld [vmem:[#allocation13 + $0x4] sm:$0xf]
        %v1886 = vld [vmem:[#allocation13 + $0x8] sm:$0xf]
        %v1887 = vld [vmem:[#allocation13 + $0xc] sm:$0xf]
        %v1888 = vld [vmem:[#allocation18] sm:$0x1]
        %v1890 = vlaneseq
        %v1891 = vshrl.u32 %v1890, 7
        %v1892 = vsub.s32 0, %v1891
        %v1893 = vrot.slane %v1888, %v1892
        %v1899 = vunpack.c.l.b16 %v1884
        %v1900 = vunpack.c.l.b16 %v1885
        %v1901 = vunpack.c.l.b16 %v1886
        %v1902 = vunpack.c.l.b16 %v1887
        %v1903 = vpack.c.b16 %v1900, %v1899
        %v1904 = vpack.c.b16 %v1902, %v1901
        %v1908 = vsel %vm959, %v1883, 0
        %1910 = vmatprep.subr.bf16.mxu0 0
        %1911 = vmatpush1.bf16.msra.mxu0 %v1903
        %1912 = vmatprep.subr.bf16.mxu0 0
        %1913 = vmatpush1.bf16.msra.mxu0 %v1904
        %1914 = vmatprep.subr.bf16.mxu0 0
        %1915 = vmatpush1.bf16.msra.mxu0 0
        %1916 = vmatprep.subr.bf16.mxu0 0
        %1917 = vmatpush1.bf16.msra.mxu0 0
        %1918 = vmatprep.subr.bf16.mxu0 0
        %1919 = vmatpush1.bf16.msra.mxu0 0
        %1920 = vmatprep.subr.bf16.mxu0 0
        %1921 = vmatpush1.bf16.msra.mxu0 0
        %1922 = vmatprep.subr.bf16.mxu0 0
        %1923 = vmatpush1.bf16.msra.mxu0 0
        %1924 = vmatprep.subr.bf16.mxu0 0
        %1925 = vmatpush1.bf16.msra.mxu0 0
        %1926 = vmatprep.subr.bf16.mxu0 0
        %1927 = vmatpush1.bf16.msra.mxu0 0
        %1928 = vmatprep.subr.bf16.mxu0 0
        %1929 = vmatpush1.bf16.msra.mxu0 0
        %1930 = vmatprep.subr.bf16.mxu0 0
        %1931 = vmatpush1.bf16.msra.mxu0 0
        %1932 = vmatprep.subr.bf16.mxu0 0
        %1933 = vmatpush1.bf16.msra.mxu0 0
        %1934 = vmatprep.subr.bf16.mxu0 0
        %1935 = vmatpush1.bf16.msra.mxu0 0
        %1936 = vmatprep.subr.bf16.mxu0 0
        %1937 = vmatpush1.bf16.msra.mxu0 0
        %1938 = vmatprep.subr.bf16.mxu0 0
        %1939 = vmatpush1.bf16.msra.mxu0 0
        %1940 = vmatprep.subr.bf16.mxu0 0
        %1941 = vmatpush1.bf16.msra.mxu0 0
        %1942 = vmatprep.mubr.bf16.mxu0 0
        %1943 = vmatmul.mubr.bf16.gmra.mrb[0].mxu0 %v1908
        %v1944 = vpop.f32.mrb[0].mxu0
        %v1945 = vadd.f32 %v1893, %v1944
        %v1946 = vpop.f32.mrb[0].mxu0
        %v1947 = vpop.f32.mrb[0].mxu0
        %v1948 = vpop.f32.mrb[0].mxu0
        %1949 = vdwg.mxu0
        %v1950 = vmul.f32 %v1945, 0.5
        %v1951 = vmul.f32 %v1945, 0.044715
        %v1952 = vmul.f32 %v1951, %v1945
        %v1953 = vmul.f32 %v1952, %v1945
        %v1954 = vadd.f32 %v1945, %v1953
        %v1955 = vmul.f32 %v1954, 0.7978846
        %v1956 = vtanh.pop %v1955
        %v1957 = vadd.f32 %v1956, 1.0
        %v1958 = vmul.f32 %v1950, %v1957
        %v1959 = vpack.c.bf16 %v1958, %v1958
        %v1960 = vld [vmem:[#allocation15] sm:$0xf]
        %v1961 = vld [vmem:[#allocation15 + $0x4] sm:$0xf]
        %v1962 = vld [vmem:[#allocation15 + $0x8] sm:$0xf]
        %v1963 = vld [vmem:[#allocation15 + $0xc] sm:$0xf]
        %v1964 = vld [vmem:[#allocation15 + $0x10] sm:$0xf]
        %v1965 = vld [vmem:[#allocation15 + $0x14] sm:$0xf]
        %v1966 = vld [vmem:[#allocation15 + $0x18] sm:$0xf]
        %v1967 = vld [vmem:[#allocation15 + $0x1c] sm:$0xf]
        %v1968 = vld [vmem:[#allocation15 + $0x20] sm:$0xf]
        %v1969 = vld [vmem:[#allocation15 + $0x24] sm:$0xf]
        %v1970 = vld [vmem:[#allocation15 + $0x28] sm:$0xf]
        %v1971 = vld [vmem:[#allocation15 + $0x2c] sm:$0xf]
        %v1972 = vld [vmem:[#allocation15 + $0x30] sm:$0xf]
        %v1973 = vld [vmem:[#allocation15 + $0x34] sm:$0xf]
        %v1974 = vld [vmem:[#allocation15 + $0x38] sm:$0xf]
        %v1975 = vld [vmem:[#allocation15 + $0x3c] sm:$0xf]
        %v1976 = vlaneseq
        %v1977 = vshrl.u32 %v1976, 7
        %v1978 = vsub.s32 0, %v1977
        %v1979 = vrot.slane %v485, %v1978
        %v1996 = vunpack.c.l.b16 %v1960
        %v1997 = vunpack.c.l.b16 %v1961
        %v1998 = vunpack.c.l.b16 %v1962
        %v1999 = vunpack.c.l.b16 %v1963
        %v2000 = vunpack.c.l.b16 %v1964
        %v2001 = vunpack.c.l.b16 %v1965
        %v2002 = vunpack.c.l.b16 %v1966
        %v2003 = vunpack.c.l.b16 %v1967
        %v2004 = vunpack.c.l.b16 %v1968
        %v2005 = vunpack.c.l.b16 %v1969
        %v2006 = vunpack.c.l.b16 %v1970
        %v2007 = vunpack.c.l.b16 %v1971
        %v2008 = vunpack.c.l.b16 %v1972
        %v2009 = vunpack.c.l.b16 %v1973
        %v2010 = vunpack.c.l.b16 %v1974
        %v2011 = vunpack.c.l.b16 %v1975
        %v2012 = vpack.c.b16 %v1997, %v1996
        %v2013 = vpack.c.b16 %v1999, %v1998
        %v2014 = vpack.c.b16 %v2001, %v2000
        %v2015 = vpack.c.b16 %v2003, %v2002
        %v2016 = vpack.c.b16 %v2005, %v2004
        %v2017 = vpack.c.b16 %v2007, %v2006
        %v2018 = vpack.c.b16 %v2009, %v2008
        %v2019 = vpack.c.b16 %v2011, %v2010
        %2028 = vmatprep.subr.bf16.mxu0 0
        %2029 = vmatpush1.bf16.msra.mxu0 %v2012
        %2030 = vmatprep.subr.bf16.mxu0 0
        %2031 = vmatpush1.bf16.msra.mxu0 %v2013
        %2032 = vmatprep.subr.bf16.mxu0 0
        %2033 = vmatpush1.bf16.msra.mxu0 %v2014
        %2034 = vmatprep.subr.bf16.mxu0 0
        %2035 = vmatpush1.bf16.msra.mxu0 %v2015
        %2036 = vmatprep.subr.bf16.mxu0 0
        %2037 = vmatpush1.bf16.msra.mxu0 %v2016
        %2038 = vmatprep.subr.bf16.mxu0 0
        %2039 = vmatpush1.bf16.msra.mxu0 %v2017
        %2040 = vmatprep.subr.bf16.mxu0 0
        %2041 = vmatpush1.bf16.msra.mxu0 %v2018
        %2042 = vmatprep.subr.bf16.mxu0 0
        %2043 = vmatpush1.bf16.msra.mxu0 %v2019
        %2044 = vmatprep.subr.bf16.mxu0 0
        %2045 = vmatpush1.bf16.msra.mxu0 0
        %2046 = vmatprep.subr.bf16.mxu0 0
        %2047 = vmatpush1.bf16.msra.mxu0 0
        %2048 = vmatprep.subr.bf16.mxu0 0
        %2049 = vmatpush1.bf16.msra.mxu0 0
        %2050 = vmatprep.subr.bf16.mxu0 0
        %2051 = vmatpush1.bf16.msra.mxu0 0
        %2052 = vmatprep.subr.bf16.mxu0 0
        %2053 = vmatpush1.bf16.msra.mxu0 0
        %2054 = vmatprep.subr.bf16.mxu0 0
        %2055 = vmatpush1.bf16.msra.mxu0 0
        %2056 = vmatprep.subr.bf16.mxu0 0
        %2057 = vmatpush1.bf16.msra.mxu0 0
        %2058 = vmatprep.subr.bf16.mxu0 0
        %2059 = vmatpush1.bf16.msra.mxu0 0
        %2060 = vmatprep.mubr.bf16.mxu0 0
        %2061 = vmatmul.mubr.bf16.gmra.mrb[0].mxu0 %v1959
        %v2062 = vpop.f32.mrb[0].mxu0
        %v2063 = vadd.f32 %v1979, %v2062
        %v2064 = vpop.f32.mrb[0].mxu0
        %v2065 = vpop.f32.mrb[0].mxu0
        %v2066 = vpop.f32.mrb[0].mxu0
        %2067 = vdwg.mxu0
        %v2068 = vadd.f32 %v1852, %v2063
        %2069 = vst.msk [vmem:[%s475] sm:$0xff] %vm959, %v2068
        %s2070 = sand.u32 %s246, 1
        %s2071 = scalar_lea.sflag [#allocation6], %s2070
        %s2072 = sand.u32 %s246, 1
        %s2073 = smul.addr %s2072, 8
        %s2074 = scalar_lea.vmem [#allocation19], %s2073
        // Predicated region
        $region97: #{tpu_custom_call.1} parent=55 // pred_check
          %p2075 = pneg %p256
        $region98: #{tpu_custom_call.1} parent=55 // pred_check_branch
          %2077 = sbr.rel (%p2075) target = $region100
        $region99: #{tpu_custom_call.1} parent=55 // pred_region
          %s2079 = ssub.s32 128, 128
          %2080 = vsyncadd %s2071, %s2079
          %s2081 = sadd.s32 %s35, %s34
          %s2082 = smul.addr %s2081, 128
          %s2083 = scalar_lea.hbm %s9, %s2082
          %s2085 = sshll.u32 %s2074, 4
          %s2086 = int_to_ptr.vmem [resolvable:$true] %s2085
          %2088 = dma.vmem_to_hbm [thread:$0]  %s2086, 128, %s2083, %s2071
        $region100: #{tpu_custom_call.1} parent=55 // pred_fallthru
          _
      $region56: #{tpu_custom_call.1} parent=5 // pred_fallthru
        _
      %p2089 = scmp.le.s32.totalorder 2, %s25
      // Predicated region
      $region101: #{tpu_custom_call.1} parent=5 // pred_check
        %p2090 = pneg %p2089
      $region102: #{tpu_custom_call.1} parent=5 // pred_check_branch
        %2092 = sbr.rel (%p2090) target = $region104
      $region103: #{tpu_custom_call.1} parent=5 // pred_region
        %s2093 = ssub.s32 %s25, 2
        // Predicated region
        $region105: #{tpu_custom_call.1} parent=103 // pred_check
          %p2094 = pneg %p262
        $region106: #{tpu_custom_call.1} parent=103 // pred_check_branch
          %2096 = sbr.rel (%p2094) target = $region108
        $region107: #{tpu_custom_call.1} parent=103 // pred_region
          %s2097 = sand.u32 %s247, 1
          %s2098 = scalar_lea.sflag [#allocation6], %s2097
          %s2099 = sand.u32 %s247, 1
          %s2100 = smul.addr %s2099, 8
          %s2101 = scalar_lea.vmem [#allocation19], %s2100
          %2102 = dma.done %s2098, 128
        $region108: #{tpu_custom_call.1} parent=103 // pred_fallthru
          _
      $region104: #{tpu_custom_call.1} parent=5 // pred_fallthru
        _
    $region6: #{tpu_custom_call.1} parent=1 // loop_footer
      %s29 = sadd.s32 1, %s25
    $region7: #{tpu_custom_call.1} parent=1 // loop_footer_branch
      %24 = sbr.rel target = $region3
    $region8: #{tpu_custom_call.1} parent=1 // loop_exit
      _
    %2103 = vsyncpa [#allocation5], 1
    %s2104 = scalar_lea.sflag [#allocation5], 1
    %2105 = vsyncpa %s2104, 1
    %2106 = vsyncpa [#allocation8], 1
    %2107 = vsyncpa [#allocation11], 1
    %2108 = vsyncpa [#allocation14], 1
    %2109 = vsyncpa [#allocation17], 1
    %2110 = vsyncpa [#allocation6], 1
    %s2111 = scalar_lea.sflag [#allocation6], 1
    %2112 = vsyncpa %s2111, 1

</llo_original>
